<compile_context>
chip_gen: v7x
topology: tpu7x:2x2x1
jax: 0.10.0
libtpu: 0.0.40
codegen_flags: <defaults>
</compile_context>

<pallas_src>
import functools

import jax
import jax.numpy as jnp
from jax.experimental import pallas as pl
from jax.experimental.pallas import tpu as pltpu

EPS = 1e-5
FUSED_MAX_COLS = 128 * 1024          # fused path cap (~4 MiB of in/out VMEM refs)
FALLBACK_TB = 64 * 1024              # columns per tile in the two-pass fallback
VMEM_LIMIT = 32 * 1024 * 1024


def _round_up(n, m):
    return ((n + m - 1) // m) * m


# ----------------------------------------------------------------------------
# Fused single-kernel path: stats + fold + apply, x resident in VMEM once.
# ----------------------------------------------------------------------------
def _fused_kernel(w1_ref, gamma_ref, beta_ref, w2_ref, b2_ref, x_ref, o_ref, *, batch):
    """w1 (4,3), gamma/beta (4,), w2 (5,4), b2 (5,) in SMEM.
    x_ref (3, S, 128) f32 VMEM (zero padded past `batch`); o_ref (5, S, 128)."""
    S = x_ref.shape[1]
    x0 = x_ref[0]          # (S, 128) full-vreg tiles, batch on sublane x lane
    x1 = x_ref[1]
    x2 = x_ref[2]

    row = jax.lax.broadcasted_iota(jnp.int32, (S, 128), 0)
    col = jax.lax.broadcasted_iota(jnp.int32, (S, 128), 1)
    valid = (row * 128 + col) < batch          # mask padded tail columns
    inv_b = 1.0 / batch                        # compile-time constant

    # Per-feature batch statistics of h = W1 @ x (linear1 bias cancels in BN).
    s_list = []
    t_list = []
    for f in range(4):
        h = w1_ref[f, 0] * x0 + w1_ref[f, 1] * x1 + w1_ref[f, 2] * x2   # (S,128)
        hm = jnp.where(valid, h, 0.0)
        sum_f = jnp.sum(jnp.sum(hm, axis=1, keepdims=True), axis=0, keepdims=True)  # (1,1)
        mean_f = sum_f * inv_b
        hc = jnp.where(valid, h - mean_f, 0.0)                          # centered, masked
        var_f = jnp.sum(jnp.sum(hc * hc, axis=1, keepdims=True),
                        axis=0, keepdims=True) * inv_b                  # biased variance
        s_f = gamma_ref[f] * jax.lax.rsqrt(var_f + EPS)                 # (1,1)
        t_f = beta_ref[f] - s_f * mean_f                                # (1,1)
        s_list.append(s_f)
        t_list.append(t_f)

    # Fold BN affine + linear2 into C (5,3) / b' (5,) as (1,1) values, then apply.
    for j in range(5):
        c = []
        for k in range(3):
            ck = w2_ref[j, 0] * s_list[0] * w1_ref[0, k]
            for f in range(1, 4):
                ck = ck + w2_ref[j, f] * s_list[f] * w1_ref[f, k]
            c.append(ck)
        bb = b2_ref[j] + w2_ref[j, 0] * t_list[0]
        for f in range(1, 4):
            bb = bb + w2_ref[j, f] * t_list[f]
        o_ref[j] = c[0] * x0 + c[1] * x1 + c[2] * x2 + bb               # (S,128) dense store


# ----------------------------------------------------------------------------
# Two-pass tiled fallback (very large batches).
# ----------------------------------------------------------------------------
def _stats_kernel(w1_ref, x_ref, stats_ref, *, batch):
    """Pass 1: per-lane partial sum / sumsq of h = W1 @ x.
    w1 (4,3) SMEM; x tile (3, TS, 128) VMEM; stats_ref (8,128) resident accumulator
    (rows 0-3 = per-lane sum of h_f, rows 4-7 = per-lane sumsq)."""
    t = pl.program_id(0)

    @pl.when(t == 0)
    def _():
        stats_ref[...] = jnp.zeros_like(stats_ref)

    TS = x_ref.shape[1]
    x0 = x_ref[0]
    x1 = x_ref[1]
    x2 = x_ref[2]
    row = jax.lax.broadcasted_iota(jnp.int32, (TS, 128), 0)
    col = jax.lax.broadcasted_iota(jnp.int32, (TS, 128), 1)
    idx = (t * TS + row) * 128 + col
    valid = idx < batch

    for f in range(4):
        h = w1_ref[f, 0] * x0 + w1_ref[f, 1] * x1 + w1_ref[f, 2] * x2   # (TS,128)
        hm = jnp.where(valid, h, 0.0)
        stats_ref[f:f + 1, :] += jnp.sum(hm, axis=0, keepdims=True)
        stats_ref[4 + f:5 + f, :] += jnp.sum(hm * hm, axis=0, keepdims=True)


def _apply_kernel(cb_ref, x_ref, o_ref):
    """Pass 2: o = C @ x + b'.  cb (5,4) SMEM (cols 0-2 = C, col 3 = folded bias);
    x tile (3, TS, 128); o tile (5, TS, 128) lane-dense."""
    x0 = x_ref[0]
    x1 = x_ref[1]
    x2 = x_ref[2]
    for j in range(5):
        o_ref[j] = (cb_ref[j, 0] * x0 + cb_ref[j, 1] * x1
                    + cb_ref[j, 2] * x2 + cb_ref[j, 3])


# ----------------------------------------------------------------------------
# Wrapper
# ----------------------------------------------------------------------------
def model_forward(x, params, *, force_two_pass=False):
    """x: (B, 3) float32 -> (B, 5) float32, matching ModelForTest.forward
    (BatchNorm1d in training mode, i.e. batch statistics)."""
    B = x.shape[0]
    w1 = params["w1"].astype(jnp.float32)        # (4, 3)  PyTorch (out, in)
    gamma = params["gamma"].astype(jnp.float32)  # (4,)
    beta = params["beta"].astype(jnp.float32)    # (4,)
    w2 = params["w2"].astype(jnp.float32)        # (5, 4)
    b2 = params["b2"].astype(jnp.float32)        # (5,)
    # linear1 bias is cancelled exactly by the BN mean subtraction -> never enters kernels.

    Bp = _round_up(max(B, 1), 1024)              # multiple of 8*128 -> dense (8,128) tiling
    use_fused = (not force_two_pass) and (Bp <= FUSED_MAX_COLS)
    if not use_fused:
        TB = 1024 if force_two_pass else FALLBACK_TB
        Bp = _round_up(max(B, 1), TB)

    S = Bp // 128
    # Layout plumbing: batch on (sublane, lane).  TODO(synk): for huge B this pad+
    # transpose is one extra HBM pass; it is negligible at the sizes tested here.
    xt = jnp.pad(x.astype(jnp.float32).T, ((0, 0), (0, Bp - B))).reshape(3, S, 128)

    if use_fused:
        out3 = pl.pallas_call(
            functools.partial(_fused_kernel, batch=B),
            out_shape=jax.ShapeDtypeStruct((5, S, 128), jnp.float32),
            in_specs=[
                pl.BlockSpec(memory_space=pltpu.MemorySpace.SMEM),   # w1
                pl.BlockSpec(memory_space=pltpu.MemorySpace.SMEM),   # gamma
                pl.BlockSpec(memory_space=pltpu.MemorySpace.SMEM),   # beta
                pl.BlockSpec(memory_space=pltpu.MemorySpace.SMEM),   # w2
                pl.BlockSpec(memory_space=pltpu.MemorySpace.SMEM),   # b2
                pl.BlockSpec(memory_space=pltpu.MemorySpace.VMEM),   # x (3,S,128)
            ],
            out_specs=pl.BlockSpec(memory_space=pltpu.MemorySpace.VMEM),
            compiler_params=pltpu.CompilerParams(vmem_limit_bytes=VMEM_LIMIT),
        )(w1, gamma, beta, w2, b2, xt)
    else:
        TS = TB // 128
        n_tiles = Bp // TB

        # ---- pass 1: per-lane partial sum / sumsq of h over the batch ----
        stats = pl.pallas_call(
            functools.partial(_stats_kernel, batch=B),
            out_shape=jax.ShapeDtypeStruct((8, 128), jnp.float32),
            grid_spec=pltpu.PrefetchScalarGridSpec(
                num_scalar_prefetch=0,
                grid=(n_tiles,),
                in_specs=[
                    pl.BlockSpec(memory_space=pltpu.MemorySpace.SMEM),   # w1 (4,3)
                    pl.BlockSpec((3, TS, 128), lambda t: (0, t, 0)),     # x tile
                ],
                out_specs=pl.BlockSpec((8, 128), lambda t: (0, 0)),      # resident acc
            ),
            compiler_params=pltpu.CompilerParams(
                dimension_semantics=("arbitrary",),
                vmem_limit_bytes=VMEM_LIMIT),
        )(w1, xt)

        # ---- fold BN affine + linear2 (tiny XLA; negligible vs the large-B kernels) ----
        sum_h = jnp.sum(stats[:4], axis=1)                  # (4,)
        sumsq_h = jnp.sum(stats[4:], axis=1)                # (4,)
        mean = sum_h / B
        var = jnp.maximum(sumsq_h / B - mean * mean, 0.0)   # biased (1/N) variance
        s = gamma * jax.lax.rsqrt(var + EPS)                # (4,)
        c_mat = (w2 * s[None, :]) @ w1                      # (5, 3)
        b_fold = b2 + w2 @ (beta - s * mean)                # (5,)
        cb = jnp.concatenate([c_mat, b_fold[:, None]], axis=1)  # (5, 4)

        # ---- pass 2: o = C @ x + b', lane-dense (5, TS, 128) output tiles ----
        out3 = pl.pallas_call(
            _apply_kernel,
            out_shape=jax.ShapeDtypeStruct((5, S, 128), jnp.float32),
            grid_spec=pltpu.PrefetchScalarGridSpec(
                num_scalar_prefetch=0,
                grid=(n_tiles,),
                in_specs=[
                    pl.BlockSpec(memory_space=pltpu.MemorySpace.SMEM),   # cb (5,4)
                    pl.BlockSpec((3, TS, 128), lambda t: (0, t, 0)),
                ],
                out_specs=pl.BlockSpec((5, TS, 128), lambda t: (0, t, 0)),
            ),
            compiler_params=pltpu.CompilerParams(
                dimension_semantics=("parallel",),
                vmem_limit_bytes=VMEM_LIMIT),
        )(cb, xt)

    return out3.reshape(5, Bp)[:, :B].T  # back to module layout (B, 5)


def init_params(key):
    """Deterministic synthetic parameters matching the PyTorch module's shapes
    (PyTorch convention: Linear weight is (out_features, in_features))."""
    k1, k2, k3, k4, k5, k6 = jax.random.split(key, 6)
    return dict(
        w1=jax.random.normal(k1, (4, 3), jnp.float32) * 0.5,
        b1=jax.random.normal(k2, (4,), jnp.float32) * 0.1,   # used only by the reference
        gamma=1.0 + 0.1 * jax.random.normal(k5, (4,), jnp.float32),
        beta=0.1 * jax.random.normal(k6, (4,), jnp.float32),
        w2=jax.random.normal(k3, (5, 4), jnp.float32) * 0.5,
        b2=jax.random.normal(k4, (5,), jnp.float32) * 0.1,
    )


def _reference(x, p):
    """Pure-JAX reference with full PyTorch training-mode semantics (incl. b1)."""
    h = x @ p["w1"].T + p["b1"]
    mean = jnp.mean(h, axis=0, keepdims=True)
    var = jnp.mean((h - mean) ** 2, axis=0, keepdims=True)   # biased variance
    hn = (h - mean) * jax.lax.rsqrt(var + EPS) * p["gamma"] + p["beta"]
    return hn @ p["w2"].T + p["b2"]


# TODO(synk): BatchNorm1d's running_mean/running_var buffer update (a training-mode
# side effect) is not produced; only the forward output is computed.

if __name__ == "__main__":
    key = jax.random.PRNGKey(0)
    kp, kx, kx2 = jax.random.split(key, 3)
    params = init_params(kp)

    fwd = jax.jit(model_forward, static_argnames=("force_two_pass",))

    # Fused single-kernel path (small batch, >1 so batch statistics are well-defined).
    B = 16
    x = jax.random.normal(kx, (B, 3), jnp.float32)
    out = jax.block_until_ready(fwd(x, params))
    ref = _reference(x, params)
    assert out.shape == (B, 5)
    assert jnp.allclose(out, ref, atol=1e-4, rtol=1e-4), "fused path mismatch vs reference"

    # Two-pass tiled fallback path, exercised with a small forced tile size.
    B2 = 3000
    x2 = jax.random.normal(kx2, (B2, 3), jnp.float32)
    out2 = jax.block_until_ready(fwd(x2, params, force_two_pass=True))
    ref2 = _reference(x2, params)
    assert out2.shape == (B2, 5)
    assert jnp.allclose(out2, ref2, atol=1e-4, rtol=1e-4), "tiled path mismatch vs reference"

    print("KERNEL_OK")
</pallas_src>

<mosaic_0001>
module attributes {stable_mosaic.version = 11 : i64} {
  func.func @_fused_kernel(%arg0: memref<4x3xf32, #tpu.memory_space<smem>>, %arg1: memref<4xf32, #tpu.memory_space<smem>>, %arg2: memref<4xf32, #tpu.memory_space<smem>>, %arg3: memref<5x4xf32, #tpu.memory_space<smem>>, %arg4: memref<5xf32, #tpu.memory_space<smem>>, %arg5: memref<3x8x128xf32, #tpu.memory_space<vmem>>, %arg6: memref<5x8x128xf32, #tpu.memory_space<vmem>>) attributes {dimension_semantics = [], scalar_prefetch = 0 : i64, scratch_operands = 0 : i64, tpu.core_type = #tpu.core_type<tc>} {
    %c0 = arith.constant 0 : index
    %c0_0 = arith.constant 0 : index
    %c0_1 = arith.constant 0 : index
    %0 = vector.load %arg5[%c0, %c0_0, %c0_1] : memref<3x8x128xf32, #tpu.memory_space<vmem>>, vector<1x8x128xf32>
    %1 = vector.shape_cast %0 : vector<1x8x128xf32> to vector<8x128xf32>
    %c1 = arith.constant 1 : index
    %c0_2 = arith.constant 0 : index
    %c0_3 = arith.constant 0 : index
    %2 = vector.load %arg5[%c1, %c0_2, %c0_3] : memref<3x8x128xf32, #tpu.memory_space<vmem>>, vector<1x8x128xf32>
    %3 = vector.shape_cast %2 : vector<1x8x128xf32> to vector<8x128xf32>
    %c2 = arith.constant 2 : index
    %c0_4 = arith.constant 0 : index
    %c0_5 = arith.constant 0 : index
    %4 = vector.load %arg5[%c2, %c0_4, %c0_5] : memref<3x8x128xf32, #tpu.memory_space<vmem>>, vector<1x8x128xf32>
    %5 = vector.shape_cast %4 : vector<1x8x128xf32> to vector<8x128xf32>
    %6 = tpu.iota {dimensions = array<i32: 0>} : vector<8x128xi32>
    %7 = tpu.iota {dimensions = array<i32: 1>} : vector<8x128xi32>
    %c128_i32 = arith.constant 128 : i32
    %8 = vector.broadcast %c128_i32 : i32 to vector<8x128xi32>
    %9 = arith.muli %6, %8 : vector<8x128xi32>
    %10 = arith.addi %9, %7 : vector<8x128xi32>
    %c16_i32 = arith.constant 16 : i32
    %11 = vector.broadcast %c16_i32 : i32 to vector<8x128xi32>
    %12 = arith.cmpi slt, %10, %11 : vector<8x128xi32>
    %c0_6 = arith.constant 0 : index
    %c0_7 = arith.constant 0 : index
    %13 = memref.load %arg0[%c0_6, %c0_7] : memref<4x3xf32, #tpu.memory_space<smem>>
    %14 = vector.broadcast %13 : f32 to vector<8x128xf32>
    %15 = arith.mulf %14, %1 : vector<8x128xf32>
    %c0_8 = arith.constant 0 : index
    %c1_9 = arith.constant 1 : index
    %16 = memref.load %arg0[%c0_8, %c1_9] : memref<4x3xf32, #tpu.memory_space<smem>>
    %17 = vector.broadcast %16 : f32 to vector<8x128xf32>
    %18 = arith.mulf %17, %3 : vector<8x128xf32>
    %19 = arith.addf %15, %18 : vector<8x128xf32>
    %c0_10 = arith.constant 0 : index
    %c2_11 = arith.constant 2 : index
    %20 = memref.load %arg0[%c0_10, %c2_11] : memref<4x3xf32, #tpu.memory_space<smem>>
    %21 = vector.broadcast %20 : f32 to vector<8x128xf32>
    %22 = arith.mulf %21, %5 : vector<8x128xf32>
    %23 = arith.addf %19, %22 : vector<8x128xf32>
    %cst = arith.constant 0.000000e+00 : f32
    %24 = vector.broadcast %cst : f32 to vector<8x128xf32>
    %25 = arith.select %12, %23, %24 : vector<8x128xi1>, vector<8x128xf32>
    %cst_12 = arith.constant dense<0.000000e+00> : vector<8xf32>
    %26 = vector.multi_reduction <add>, %25, %cst_12 [1] : vector<8x128xf32> to vector<8xf32>
    %27 = vector.shape_cast %26 : vector<8xf32> to vector<8x1xf32>
    %cst_13 = arith.constant dense<0.000000e+00> : vector<1xf32>
    %28 = vector.multi_reduction <add>, %27, %cst_13 [0] : vector<8x1xf32> to vector<1xf32>
    %29 = vector.shape_cast %28 : vector<1xf32> to vector<1x1xf32>
    %cst_14 = arith.constant 6.250000e-02 : f32
    %30 = vector.broadcast %cst_14 : f32 to vector<1x1xf32>
    %31 = arith.mulf %29, %30 : vector<1x1xf32>
    %32 = vector.broadcast %31 : vector<1x1xf32> to vector<8x128xf32>
    %33 = arith.subf %23, %32 : vector<8x128xf32>
    %cst_15 = arith.constant 0.000000e+00 : f32
    %34 = vector.broadcast %cst_15 : f32 to vector<8x128xf32>
    %35 = arith.select %12, %33, %34 : vector<8x128xi1>, vector<8x128xf32>
    %36 = arith.mulf %35, %35 : vector<8x128xf32>
    %cst_16 = arith.constant dense<0.000000e+00> : vector<8xf32>
    %37 = vector.multi_reduction <add>, %36, %cst_16 [1] : vector<8x128xf32> to vector<8xf32>
    %38 = vector.shape_cast %37 : vector<8xf32> to vector<8x1xf32>
    %cst_17 = arith.constant dense<0.000000e+00> : vector<1xf32>
    %39 = vector.multi_reduction <add>, %38, %cst_17 [0] : vector<8x1xf32> to vector<1xf32>
    %40 = vector.shape_cast %39 : vector<1xf32> to vector<1x1xf32>
    %cst_18 = arith.constant 6.250000e-02 : f32
    %41 = vector.broadcast %cst_18 : f32 to vector<1x1xf32>
    %42 = arith.mulf %40, %41 : vector<1x1xf32>
    %c0_19 = arith.constant 0 : index
    %43 = memref.load %arg1[%c0_19] : memref<4xf32, #tpu.memory_space<smem>>
    %cst_20 = arith.constant 9.99999974E-6 : f32
    %44 = vector.broadcast %cst_20 : f32 to vector<1x1xf32>
    %45 = arith.addf %42, %44 : vector<1x1xf32>
    %46 = math.rsqrt %45 : vector<1x1xf32>
    %47 = vector.broadcast %43 : f32 to vector<1x1xf32>
    %48 = arith.mulf %47, %46 : vector<1x1xf32>
    %c0_21 = arith.constant 0 : index
    %49 = memref.load %arg2[%c0_21] : memref<4xf32, #tpu.memory_space<smem>>
    %50 = arith.mulf %48, %31 : vector<1x1xf32>
    %51 = vector.broadcast %49 : f32 to vector<1x1xf32>
    %52 = arith.subf %51, %50 : vector<1x1xf32>
    %c1_22 = arith.constant 1 : index
    %c0_23 = arith.constant 0 : index
    %53 = memref.load %arg0[%c1_22, %c0_23] : memref<4x3xf32, #tpu.memory_space<smem>>
    %54 = vector.broadcast %53 : f32 to vector<8x128xf32>
    %55 = arith.mulf %54, %1 : vector<8x128xf32>
    %c1_24 = arith.constant 1 : index
    %c1_25 = arith.constant 1 : index
    %56 = memref.load %arg0[%c1_24, %c1_25] : memref<4x3xf32, #tpu.memory_space<smem>>
    %57 = vector.broadcast %56 : f32 to vector<8x128xf32>
    %58 = arith.mulf %57, %3 : vector<8x128xf32>
    %59 = arith.addf %55, %58 : vector<8x128xf32>
    %c1_26 = arith.constant 1 : index
    %c2_27 = arith.constant 2 : index
    %60 = memref.load %arg0[%c1_26, %c2_27] : memref<4x3xf32, #tpu.memory_space<smem>>
    %61 = vector.broadcast %60 : f32 to vector<8x128xf32>
    %62 = arith.mulf %61, %5 : vector<8x128xf32>
    %63 = arith.addf %59, %62 : vector<8x128xf32>
    %cst_28 = arith.constant 0.000000e+00 : f32
    %64 = vector.broadcast %cst_28 : f32 to vector<8x128xf32>
    %65 = arith.select %12, %63, %64 : vector<8x128xi1>, vector<8x128xf32>
    %cst_29 = arith.constant dense<0.000000e+00> : vector<8xf32>
    %66 = vector.multi_reduction <add>, %65, %cst_29 [1] : vector<8x128xf32> to vector<8xf32>
    %67 = vector.shape_cast %66 : vector<8xf32> to vector<8x1xf32>
    %cst_30 = arith.constant dense<0.000000e+00> : vector<1xf32>
    %68 = vector.multi_reduction <add>, %67, %cst_30 [0] : vector<8x1xf32> to vector<1xf32>
    %69 = vector.shape_cast %68 : vector<1xf32> to vector<1x1xf32>
    %cst_31 = arith.constant 6.250000e-02 : f32
    %70 = vector.broadcast %cst_31 : f32 to vector<1x1xf32>
    %71 = arith.mulf %69, %70 : vector<1x1xf32>
    %72 = vector.broadcast %71 : vector<1x1xf32> to vector<8x128xf32>
    %73 = arith.subf %63, %72 : vector<8x128xf32>
    %cst_32 = arith.constant 0.000000e+00 : f32
    %74 = vector.broadcast %cst_32 : f32 to vector<8x128xf32>
    %75 = arith.select %12, %73, %74 : vector<8x128xi1>, vector<8x128xf32>
    %76 = arith.mulf %75, %75 : vector<8x128xf32>
    %cst_33 = arith.constant dense<0.000000e+00> : vector<8xf32>
    %77 = vector.multi_reduction <add>, %76, %cst_33 [1] : vector<8x128xf32> to vector<8xf32>
    %78 = vector.shape_cast %77 : vector<8xf32> to vector<8x1xf32>
    %cst_34 = arith.constant dense<0.000000e+00> : vector<1xf32>
    %79 = vector.multi_reduction <add>, %78, %cst_34 [0] : vector<8x1xf32> to vector<1xf32>
    %80 = vector.shape_cast %79 : vector<1xf32> to vector<1x1xf32>
    %cst_35 = arith.constant 6.250000e-02 : f32
    %81 = vector.broadcast %cst_35 : f32 to vector<1x1xf32>
    %82 = arith.mulf %80, %81 : vector<1x1xf32>
    %c1_36 = arith.constant 1 : index
    %83 = memref.load %arg1[%c1_36] : memref<4xf32, #tpu.memory_space<smem>>
    %cst_37 = arith.constant 9.99999974E-6 : f32
    %84 = vector.broadcast %cst_37 : f32 to vector<1x1xf32>
    %85 = arith.addf %82, %84 : vector<1x1xf32>
    %86 = math.rsqrt %85 : vector<1x1xf32>
    %87 = vector.broadcast %83 : f32 to vector<1x1xf32>
    %88 = arith.mulf %87, %86 : vector<1x1xf32>
    %c1_38 = arith.constant 1 : index
    %89 = memref.load %arg2[%c1_38] : memref<4xf32, #tpu.memory_space<smem>>
    %90 = arith.mulf %88, %71 : vector<1x1xf32>
    %91 = vector.broadcast %89 : f32 to vector<1x1xf32>
    %92 = arith.subf %91, %90 : vector<1x1xf32>
    %c2_39 = arith.constant 2 : index
    %c0_40 = arith.constant 0 : index
    %93 = memref.load %arg0[%c2_39, %c0_40] : memref<4x3xf32, #tpu.memory_space<smem>>
    %94 = vector.broadcast %93 : f32 to vector<8x128xf32>
    %95 = arith.mulf %94, %1 : vector<8x128xf32>
    %c2_41 = arith.constant 2 : index
    %c1_42 = arith.constant 1 : index
    %96 = memref.load %arg0[%c2_41, %c1_42] : memref<4x3xf32, #tpu.memory_space<smem>>
    %97 = vector.broadcast %96 : f32 to vector<8x128xf32>
    %98 = arith.mulf %97, %3 : vector<8x128xf32>
    %99 = arith.addf %95, %98 : vector<8x128xf32>
    %c2_43 = arith.constant 2 : index
    %c2_44 = arith.constant 2 : index
    %100 = memref.load %arg0[%c2_43, %c2_44] : memref<4x3xf32, #tpu.memory_space<smem>>
    %101 = vector.broadcast %100 : f32 to vector<8x128xf32>
    %102 = arith.mulf %101, %5 : vector<8x128xf32>
    %103 = arith.addf %99, %102 : vector<8x128xf32>
    %cst_45 = arith.constant 0.000000e+00 : f32
    %104 = vector.broadcast %cst_45 : f32 to vector<8x128xf32>
    %105 = arith.select %12, %103, %104 : vector<8x128xi1>, vector<8x128xf32>
    %cst_46 = arith.constant dense<0.000000e+00> : vector<8xf32>
    %106 = vector.multi_reduction <add>, %105, %cst_46 [1] : vector<8x128xf32> to vector<8xf32>
    %107 = vector.shape_cast %106 : vector<8xf32> to vector<8x1xf32>
    %cst_47 = arith.constant dense<0.000000e+00> : vector<1xf32>
    %108 = vector.multi_reduction <add>, %107, %cst_47 [0] : vector<8x1xf32> to vector<1xf32>
    %109 = vector.shape_cast %108 : vector<1xf32> to vector<1x1xf32>
    %cst_48 = arith.constant 6.250000e-02 : f32
    %110 = vector.broadcast %cst_48 : f32 to vector<1x1xf32>
    %111 = arith.mulf %109, %110 : vector<1x1xf32>
    %112 = vector.broadcast %111 : vector<1x1xf32> to vector<8x128xf32>
    %113 = arith.subf %103, %112 : vector<8x128xf32>
    %cst_49 = arith.constant 0.000000e+00 : f32
    %114 = vector.broadcast %cst_49 : f32 to vector<8x128xf32>
    %115 = arith.select %12, %113, %114 : vector<8x128xi1>, vector<8x128xf32>
    %116 = arith.mulf %115, %115 : vector<8x128xf32>
    %cst_50 = arith.constant dense<0.000000e+00> : vector<8xf32>
    %117 = vector.multi_reduction <add>, %116, %cst_50 [1] : vector<8x128xf32> to vector<8xf32>
    %118 = vector.shape_cast %117 : vector<8xf32> to vector<8x1xf32>
    %cst_51 = arith.constant dense<0.000000e+00> : vector<1xf32>
    %119 = vector.multi_reduction <add>, %118, %cst_51 [0] : vector<8x1xf32> to vector<1xf32>
    %120 = vector.shape_cast %119 : vector<1xf32> to vector<1x1xf32>
    %cst_52 = arith.constant 6.250000e-02 : f32
    %121 = vector.broadcast %cst_52 : f32 to vector<1x1xf32>
    %122 = arith.mulf %120, %121 : vector<1x1xf32>
    %c2_53 = arith.constant 2 : index
    %123 = memref.load %arg1[%c2_53] : memref<4xf32, #tpu.memory_space<smem>>
    %cst_54 = arith.constant 9.99999974E-6 : f32
    %124 = vector.broadcast %cst_54 : f32 to vector<1x1xf32>
    %125 = arith.addf %122, %124 : vector<1x1xf32>
    %126 = math.rsqrt %125 : vector<1x1xf32>
    %127 = vector.broadcast %123 : f32 to vector<1x1xf32>
    %128 = arith.mulf %127, %126 : vector<1x1xf32>
    %c2_55 = arith.constant 2 : index
    %129 = memref.load %arg2[%c2_55] : memref<4xf32, #tpu.memory_space<smem>>
    %130 = arith.mulf %128, %111 : vector<1x1xf32>
    %131 = vector.broadcast %129 : f32 to vector<1x1xf32>
    %132 = arith.subf %131, %130 : vector<1x1xf32>
    %c3 = arith.constant 3 : index
    %c0_56 = arith.constant 0 : index
    %133 = memref.load %arg0[%c3, %c0_56] : memref<4x3xf32, #tpu.memory_space<smem>>
    %134 = vector.broadcast %133 : f32 to vector<8x128xf32>
    %135 = arith.mulf %134, %1 : vector<8x128xf32>
    %c3_57 = arith.constant 3 : index
    %c1_58 = arith.constant 1 : index
    %136 = memref.load %arg0[%c3_57, %c1_58] : memref<4x3xf32, #tpu.memory_space<smem>>
    %137 = vector.broadcast %136 : f32 to vector<8x128xf32>
    %138 = arith.mulf %137, %3 : vector<8x128xf32>
    %139 = arith.addf %135, %138 : vector<8x128xf32>
    %c3_59 = arith.constant 3 : index
    %c2_60 = arith.constant 2 : index
    %140 = memref.load %arg0[%c3_59, %c2_60] : memref<4x3xf32, #tpu.memory_space<smem>>
    %141 = vector.broadcast %140 : f32 to vector<8x128xf32>
    %142 = arith.mulf %141, %5 : vector<8x128xf32>
    %143 = arith.addf %139, %142 : vector<8x128xf32>
    %cst_61 = arith.constant 0.000000e+00 : f32
    %144 = vector.broadcast %cst_61 : f32 to vector<8x128xf32>
    %145 = arith.select %12, %143, %144 : vector<8x128xi1>, vector<8x128xf32>
    %cst_62 = arith.constant dense<0.000000e+00> : vector<8xf32>
    %146 = vector.multi_reduction <add>, %145, %cst_62 [1] : vector<8x128xf32> to vector<8xf32>
    %147 = vector.shape_cast %146 : vector<8xf32> to vector<8x1xf32>
    %cst_63 = arith.constant dense<0.000000e+00> : vector<1xf32>
    %148 = vector.multi_reduction <add>, %147, %cst_63 [0] : vector<8x1xf32> to vector<1xf32>
    %149 = vector.shape_cast %148 : vector<1xf32> to vector<1x1xf32>
    %cst_64 = arith.constant 6.250000e-02 : f32
    %150 = vector.broadcast %cst_64 : f32 to vector<1x1xf32>
    %151 = arith.mulf %149, %150 : vector<1x1xf32>
    %152 = vector.broadcast %151 : vector<1x1xf32> to vector<8x128xf32>
    %153 = arith.subf %143, %152 : vector<8x128xf32>
    %cst_65 = arith.constant 0.000000e+00 : f32
    %154 = vector.broadcast %cst_65 : f32 to vector<8x128xf32>
    %155 = arith.select %12, %153, %154 : vector<8x128xi1>, vector<8x128xf32>
    %156 = arith.mulf %155, %155 : vector<8x128xf32>
    %cst_66 = arith.constant dense<0.000000e+00> : vector<8xf32>
    %157 = vector.multi_reduction <add>, %156, %cst_66 [1] : vector<8x128xf32> to vector<8xf32>
    %158 = vector.shape_cast %157 : vector<8xf32> to vector<8x1xf32>
    %cst_67 = arith.constant dense<0.000000e+00> : vector<1xf32>
    %159 = vector.multi_reduction <add>, %158, %cst_67 [0] : vector<8x1xf32> to vector<1xf32>
    %160 = vector.shape_cast %159 : vector<1xf32> to vector<1x1xf32>
    %cst_68 = arith.constant 6.250000e-02 : f32
    %161 = vector.broadcast %cst_68 : f32 to vector<1x1xf32>
    %162 = arith.mulf %160, %161 : vector<1x1xf32>
    %c3_69 = arith.constant 3 : index
    %163 = memref.load %arg1[%c3_69] : memref<4xf32, #tpu.memory_space<smem>>
    %cst_70 = arith.constant 9.99999974E-6 : f32
    %164 = vector.broadcast %cst_70 : f32 to vector<1x1xf32>
    %165 = arith.addf %162, %164 : vector<1x1xf32>
    %166 = math.rsqrt %165 : vector<1x1xf32>
    %167 = vector.broadcast %163 : f32 to vector<1x1xf32>
    %168 = arith.mulf %167, %166 : vector<1x1xf32>
    %c3_71 = arith.constant 3 : index
    %169 = memref.load %arg2[%c3_71] : memref<4xf32, #tpu.memory_space<smem>>
    %170 = arith.mulf %168, %151 : vector<1x1xf32>
    %171 = vector.broadcast %169 : f32 to vector<1x1xf32>
    %172 = arith.subf %171, %170 : vector<1x1xf32>
    %c0_72 = arith.constant 0 : index
    %c0_73 = arith.constant 0 : index
    %173 = memref.load %arg3[%c0_72, %c0_73] : memref<5x4xf32, #tpu.memory_space<smem>>
    %174 = vector.broadcast %173 : f32 to vector<1x1xf32>
    %175 = arith.mulf %174, %48 : vector<1x1xf32>
    %c0_74 = arith.constant 0 : index
    %c0_75 = arith.constant 0 : index
    %176 = memref.load %arg0[%c0_74, %c0_75] : memref<4x3xf32, #tpu.memory_space<smem>>
    %177 = vector.broadcast %176 : f32 to vector<1x1xf32>
    %178 = arith.mulf %175, %177 : vector<1x1xf32>
    %c0_76 = arith.constant 0 : index
    %c1_77 = arith.constant 1 : index
    %179 = memref.load %arg3[%c0_76, %c1_77] : memref<5x4xf32, #tpu.memory_space<smem>>
    %180 = vector.broadcast %179 : f32 to vector<1x1xf32>
    %181 = arith.mulf %180, %88 : vector<1x1xf32>
    %c1_78 = arith.constant 1 : index
    %c0_79 = arith.constant 0 : index
    %182 = memref.load %arg0[%c1_78, %c0_79] : memref<4x3xf32, #tpu.memory_space<smem>>
    %183 = vector.broadcast %182 : f32 to vector<1x1xf32>
    %184 = arith.mulf %181, %183 : vector<1x1xf32>
    %185 = arith.addf %178, %184 : vector<1x1xf32>
    %c0_80 = arith.constant 0 : index
    %c2_81 = arith.constant 2 : index
    %186 = memref.load %arg3[%c0_80, %c2_81] : memref<5x4xf32, #tpu.memory_space<smem>>
    %187 = vector.broadcast %186 : f32 to vector<1x1xf32>
    %188 = arith.mulf %187, %128 : vector<1x1xf32>
    %c2_82 = arith.constant 2 : index
    %c0_83 = arith.constant 0 : index
    %189 = memref.load %arg0[%c2_82, %c0_83] : memref<4x3xf32, #tpu.memory_space<smem>>
    %190 = vector.broadcast %189 : f32 to vector<1x1xf32>
    %191 = arith.mulf %188, %190 : vector<1x1xf32>
    %192 = arith.addf %185, %191 : vector<1x1xf32>
    %c0_84 = arith.constant 0 : index
    %c3_85 = arith.constant 3 : index
    %193 = memref.load %arg3[%c0_84, %c3_85] : memref<5x4xf32, #tpu.memory_space<smem>>
    %194 = vector.broadcast %193 : f32 to vector<1x1xf32>
    %195 = arith.mulf %194, %168 : vector<1x1xf32>
    %c3_86 = arith.constant 3 : index
    %c0_87 = arith.constant 0 : index
    %196 = memref.load %arg0[%c3_86, %c0_87] : memref<4x3xf32, #tpu.memory_space<smem>>
    %197 = vector.broadcast %196 : f32 to vector<1x1xf32>
    %198 = arith.mulf %195, %197 : vector<1x1xf32>
    %199 = arith.addf %192, %198 : vector<1x1xf32>
    %c0_88 = arith.constant 0 : index
    %c0_89 = arith.constant 0 : index
    %200 = memref.load %arg3[%c0_88, %c0_89] : memref<5x4xf32, #tpu.memory_space<smem>>
    %201 = vector.broadcast %200 : f32 to vector<1x1xf32>
    %202 = arith.mulf %201, %48 : vector<1x1xf32>
    %c0_90 = arith.constant 0 : index
    %c1_91 = arith.constant 1 : index
    %203 = memref.load %arg0[%c0_90, %c1_91] : memref<4x3xf32, #tpu.memory_space<smem>>
    %204 = vector.broadcast %203 : f32 to vector<1x1xf32>
    %205 = arith.mulf %202, %204 : vector<1x1xf32>
    %c0_92 = arith.constant 0 : index
    %c1_93 = arith.constant 1 : index
    %206 = memref.load %arg3[%c0_92, %c1_93] : memref<5x4xf32, #tpu.memory_space<smem>>
    %207 = vector.broadcast %206 : f32 to vector<1x1xf32>
    %208 = arith.mulf %207, %88 : vector<1x1xf32>
    %c1_94 = arith.constant 1 : index
    %c1_95 = arith.constant 1 : index
    %209 = memref.load %arg0[%c1_94, %c1_95] : memref<4x3xf32, #tpu.memory_space<smem>>
    %210 = vector.broadcast %209 : f32 to vector<1x1xf32>
    %211 = arith.mulf %208, %210 : vector<1x1xf32>
    %212 = arith.addf %205, %211 : vector<1x1xf32>
    %c0_96 = arith.constant 0 : index
    %c2_97 = arith.constant 2 : index
    %213 = memref.load %arg3[%c0_96, %c2_97] : memref<5x4xf32, #tpu.memory_space<smem>>
    %214 = vector.broadcast %213 : f32 to vector<1x1xf32>
    %215 = arith.mulf %214, %128 : vector<1x1xf32>
    %c2_98 = arith.constant 2 : index
    %c1_99 = arith.constant 1 : index
    %216 = memref.load %arg0[%c2_98, %c1_99] : memref<4x3xf32, #tpu.memory_space<smem>>
    %217 = vector.broadcast %216 : f32 to vector<1x1xf32>
    %218 = arith.mulf %215, %217 : vector<1x1xf32>
    %219 = arith.addf %212, %218 : vector<1x1xf32>
    %c0_100 = arith.constant 0 : index
    %c3_101 = arith.constant 3 : index
    %220 = memref.load %arg3[%c0_100, %c3_101] : memref<5x4xf32, #tpu.memory_space<smem>>
    %221 = vector.broadcast %220 : f32 to vector<1x1xf32>
    %222 = arith.mulf %221, %168 : vector<1x1xf32>
    %c3_102 = arith.constant 3 : index
    %c1_103 = arith.constant 1 : index
    %223 = memref.load %arg0[%c3_102, %c1_103] : memref<4x3xf32, #tpu.memory_space<smem>>
    %224 = vector.broadcast %223 : f32 to vector<1x1xf32>
    %225 = arith.mulf %222, %224 : vector<1x1xf32>
    %226 = arith.addf %219, %225 : vector<1x1xf32>
    %c0_104 = arith.constant 0 : index
    %c0_105 = arith.constant 0 : index
    %227 = memref.load %arg3[%c0_104, %c0_105] : memref<5x4xf32, #tpu.memory_space<smem>>
    %228 = vector.broadcast %227 : f32 to vector<1x1xf32>
    %229 = arith.mulf %228, %48 : vector<1x1xf32>
    %c0_106 = arith.constant 0 : index
    %c2_107 = arith.constant 2 : index
    %230 = memref.load %arg0[%c0_106, %c2_107] : memref<4x3xf32, #tpu.memory_space<smem>>
    %231 = vector.broadcast %230 : f32 to vector<1x1xf32>
    %232 = arith.mulf %229, %231 : vector<1x1xf32>
    %c0_108 = arith.constant 0 : index
    %c1_109 = arith.constant 1 : index
    %233 = memref.load %arg3[%c0_108, %c1_109] : memref<5x4xf32, #tpu.memory_space<smem>>
    %234 = vector.broadcast %233 : f32 to vector<1x1xf32>
    %235 = arith.mulf %234, %88 : vector<1x1xf32>
    %c1_110 = arith.constant 1 : index
    %c2_111 = arith.constant 2 : index
    %236 = memref.load %arg0[%c1_110, %c2_111] : memref<4x3xf32, #tpu.memory_space<smem>>
    %237 = vector.broadcast %236 : f32 to vector<1x1xf32>
    %238 = arith.mulf %235, %237 : vector<1x1xf32>
    %239 = arith.addf %232, %238 : vector<1x1xf32>
    %c0_112 = arith.constant 0 : index
    %c2_113 = arith.constant 2 : index
    %240 = memref.load %arg3[%c0_112, %c2_113] : memref<5x4xf32, #tpu.memory_space<smem>>
    %241 = vector.broadcast %240 : f32 to vector<1x1xf32>
    %242 = arith.mulf %241, %128 : vector<1x1xf32>
    %c2_114 = arith.constant 2 : index
    %c2_115 = arith.constant 2 : index
    %243 = memref.load %arg0[%c2_114, %c2_115] : memref<4x3xf32, #tpu.memory_space<smem>>
    %244 = vector.broadcast %243 : f32 to vector<1x1xf32>
    %245 = arith.mulf %242, %244 : vector<1x1xf32>
    %246 = arith.addf %239, %245 : vector<1x1xf32>
    %c0_116 = arith.constant 0 : index
    %c3_117 = arith.constant 3 : index
    %247 = memref.load %arg3[%c0_116, %c3_117] : memref<5x4xf32, #tpu.memory_space<smem>>
    %248 = vector.broadcast %247 : f32 to vector<1x1xf32>
    %249 = arith.mulf %248, %168 : vector<1x1xf32>
    %c3_118 = arith.constant 3 : index
    %c2_119 = arith.constant 2 : index
    %250 = memref.load %arg0[%c3_118, %c2_119] : memref<4x3xf32, #tpu.memory_space<smem>>
    %251 = vector.broadcast %250 : f32 to vector<1x1xf32>
    %252 = arith.mulf %249, %251 : vector<1x1xf32>
    %253 = arith.addf %246, %252 : vector<1x1xf32>
    %c0_120 = arith.constant 0 : index
    %254 = memref.load %arg4[%c0_120] : memref<5xf32, #tpu.memory_space<smem>>
    %c0_121 = arith.constant 0 : index
    %c0_122 = arith.constant 0 : index
    %255 = memref.load %arg3[%c0_121, %c0_122] : memref<5x4xf32, #tpu.memory_space<smem>>
    %256 = vector.broadcast %255 : f32 to vector<1x1xf32>
    %257 = arith.mulf %256, %52 : vector<1x1xf32>
    %258 = vector.broadcast %254 : f32 to vector<1x1xf32>
    %259 = arith.addf %258, %257 : vector<1x1xf32>
    %c0_123 = arith.constant 0 : index
    %c1_124 = arith.constant 1 : index
    %260 = memref.load %arg3[%c0_123, %c1_124] : memref<5x4xf32, #tpu.memory_space<smem>>
    %261 = vector.broadcast %260 : f32 to vector<1x1xf32>
    %262 = arith.mulf %261, %92 : vector<1x1xf32>
    %263 = arith.addf %259, %262 : vector<1x1xf32>
    %c0_125 = arith.constant 0 : index
    %c2_126 = arith.constant 2 : index
    %264 = memref.load %arg3[%c0_125, %c2_126] : memref<5x4xf32, #tpu.memory_space<smem>>
    %265 = vector.broadcast %264 : f32 to vector<1x1xf32>
    %266 = arith.mulf %265, %132 : vector<1x1xf32>
    %267 = arith.addf %263, %266 : vector<1x1xf32>
    %c0_127 = arith.constant 0 : index
    %c3_128 = arith.constant 3 : index
    %268 = memref.load %arg3[%c0_127, %c3_128] : memref<5x4xf32, #tpu.memory_space<smem>>
    %269 = vector.broadcast %268 : f32 to vector<1x1xf32>
    %270 = arith.mulf %269, %172 : vector<1x1xf32>
    %271 = arith.addf %267, %270 : vector<1x1xf32>
    %272 = vector.broadcast %199 : vector<1x1xf32> to vector<8x128xf32>
    %273 = arith.mulf %272, %1 : vector<8x128xf32>
    %274 = vector.broadcast %226 : vector<1x1xf32> to vector<8x128xf32>
    %275 = arith.mulf %274, %3 : vector<8x128xf32>
    %276 = arith.addf %273, %275 : vector<8x128xf32>
    %277 = vector.broadcast %253 : vector<1x1xf32> to vector<8x128xf32>
    %278 = arith.mulf %277, %5 : vector<8x128xf32>
    %279 = arith.addf %276, %278 : vector<8x128xf32>
    %280 = vector.broadcast %271 : vector<1x1xf32> to vector<8x128xf32>
    %281 = arith.addf %279, %280 : vector<8x128xf32>
    %c0_129 = arith.constant 0 : index
    %c0_130 = arith.constant 0 : index
    %c0_131 = arith.constant 0 : index
    %282 = vector.load %arg6[%c0_129, %c0_130, %c0_131] : memref<5x8x128xf32, #tpu.memory_space<vmem>>, vector<1x8x128xf32>
    %283 = vector.shape_cast %282 : vector<1x8x128xf32> to vector<8x128xf32>
    %284 = vector.shape_cast %281 : vector<8x128xf32> to vector<1x8x128xf32>
    tpu.vector_store %arg6[%c0_129, %c0_130, %c0_131], %284 {strides = array<i32>} : memref<5x8x128xf32, #tpu.memory_space<vmem>>, vector<1x8x128xf32>,
    %c1_132 = arith.constant 1 : index
    %c0_133 = arith.constant 0 : index
    %285 = memref.load %arg3[%c1_132, %c0_133] : memref<5x4xf32, #tpu.memory_space<smem>>
    %286 = vector.broadcast %285 : f32 to vector<1x1xf32>
    %287 = arith.mulf %286, %48 : vector<1x1xf32>
    %c0_134 = arith.constant 0 : index
    %c0_135 = arith.constant 0 : index
    %288 = memref.load %arg0[%c0_134, %c0_135] : memref<4x3xf32, #tpu.memory_space<smem>>
    %289 = vector.broadcast %288 : f32 to vector<1x1xf32>
    %290 = arith.mulf %287, %289 : vector<1x1xf32>
    %c1_136 = arith.constant 1 : index
    %c1_137 = arith.constant 1 : index
    %291 = memref.load %arg3[%c1_136, %c1_137] : memref<5x4xf32, #tpu.memory_space<smem>>
    %292 = vector.broadcast %291 : f32 to vector<1x1xf32>
    %293 = arith.mulf %292, %88 : vector<1x1xf32>
    %c1_138 = arith.constant 1 : index
    %c0_139 = arith.constant 0 : index
    %294 = memref.load %arg0[%c1_138, %c0_139] : memref<4x3xf32, #tpu.memory_space<smem>>
    %295 = vector.broadcast %294 : f32 to vector<1x1xf32>
    %296 = arith.mulf %293, %295 : vector<1x1xf32>
    %297 = arith.addf %290, %296 : vector<1x1xf32>
    %c1_140 = arith.constant 1 : index
    %c2_141 = arith.constant 2 : index
    %298 = memref.load %arg3[%c1_140, %c2_141] : memref<5x4xf32, #tpu.memory_space<smem>>
    %299 = vector.broadcast %298 : f32 to vector<1x1xf32>
    %300 = arith.mulf %299, %128 : vector<1x1xf32>
    %c2_142 = arith.constant 2 : index
    %c0_143 = arith.constant 0 : index
    %301 = memref.load %arg0[%c2_142, %c0_143] : memref<4x3xf32, #tpu.memory_space<smem>>
    %302 = vector.broadcast %301 : f32 to vector<1x1xf32>
    %303 = arith.mulf %300, %302 : vector<1x1xf32>
    %304 = arith.addf %297, %303 : vector<1x1xf32>
    %c1_144 = arith.constant 1 : index
    %c3_145 = arith.constant 3 : index
    %305 = memref.load %arg3[%c1_144, %c3_145] : memref<5x4xf32, #tpu.memory_space<smem>>
    %306 = vector.broadcast %305 : f32 to vector<1x1xf32>
    %307 = arith.mulf %306, %168 : vector<1x1xf32>
    %c3_146 = arith.constant 3 : index
    %c0_147 = arith.constant 0 : index
    %308 = memref.load %arg0[%c3_146, %c0_147] : memref<4x3xf32, #tpu.memory_space<smem>>
    %309 = vector.broadcast %308 : f32 to vector<1x1xf32>
    %310 = arith.mulf %307, %309 : vector<1x1xf32>
    %311 = arith.addf %304, %310 : vector<1x1xf32>
    %c1_148 = arith.constant 1 : index
    %c0_149 = arith.constant 0 : index
    %312 = memref.load %arg3[%c1_148, %c0_149] : memref<5x4xf32, #tpu.memory_space<smem>>
    %313 = vector.broadcast %312 : f32 to vector<1x1xf32>
    %314 = arith.mulf %313, %48 : vector<1x1xf32>
    %c0_150 = arith.constant 0 : index
    %c1_151 = arith.constant 1 : index
    %315 = memref.load %arg0[%c0_150, %c1_151] : memref<4x3xf32, #tpu.memory_space<smem>>
    %316 = vector.broadcast %315 : f32 to vector<1x1xf32>
    %317 = arith.mulf %314, %316 : vector<1x1xf32>
    %c1_152 = arith.constant 1 : index
    %c1_153 = arith.constant 1 : index
    %318 = memref.load %arg3[%c1_152, %c1_153] : memref<5x4xf32, #tpu.memory_space<smem>>
    %319 = vector.broadcast %318 : f32 to vector<1x1xf32>
    %320 = arith.mulf %319, %88 : vector<1x1xf32>
    %c1_154 = arith.constant 1 : index
    %c1_155 = arith.constant 1 : index
    %321 = memref.load %arg0[%c1_154, %c1_155] : memref<4x3xf32, #tpu.memory_space<smem>>
    %322 = vector.broadcast %321 : f32 to vector<1x1xf32>
    %323 = arith.mulf %320, %322 : vector<1x1xf32>
    %324 = arith.addf %317, %323 : vector<1x1xf32>
    %c1_156 = arith.constant 1 : index
    %c2_157 = arith.constant 2 : index
    %325 = memref.load %arg3[%c1_156, %c2_157] : memref<5x4xf32, #tpu.memory_space<smem>>
    %326 = vector.broadcast %325 : f32 to vector<1x1xf32>
    %327 = arith.mulf %326, %128 : vector<1x1xf32>
    %c2_158 = arith.constant 2 : index
    %c1_159 = arith.constant 1 : index
    %328 = memref.load %arg0[%c2_158, %c1_159] : memref<4x3xf32, #tpu.memory_space<smem>>
    %329 = vector.broadcast %328 : f32 to vector<1x1xf32>
    %330 = arith.mulf %327, %329 : vector<1x1xf32>
    %331 = arith.addf %324, %330 : vector<1x1xf32>
    %c1_160 = arith.constant 1 : index
    %c3_161 = arith.constant 3 : index
    %332 = memref.load %arg3[%c1_160, %c3_161] : memref<5x4xf32, #tpu.memory_space<smem>>
    %333 = vector.broadcast %332 : f32 to vector<1x1xf32>
    %334 = arith.mulf %333, %168 : vector<1x1xf32>
    %c3_162 = arith.constant 3 : index
    %c1_163 = arith.constant 1 : index
    %335 = memref.load %arg0[%c3_162, %c1_163] : memref<4x3xf32, #tpu.memory_space<smem>>
    %336 = vector.broadcast %335 : f32 to vector<1x1xf32>
    %337 = arith.mulf %334, %336 : vector<1x1xf32>
    %338 = arith.addf %331, %337 : vector<1x1xf32>
    %c1_164 = arith.constant 1 : index
    %c0_165 = arith.constant 0 : index
    %339 = memref.load %arg3[%c1_164, %c0_165] : memref<5x4xf32, #tpu.memory_space<smem>>
    %340 = vector.broadcast %339 : f32 to vector<1x1xf32>
    %341 = arith.mulf %340, %48 : vector<1x1xf32>
    %c0_166 = arith.constant 0 : index
    %c2_167 = arith.constant 2 : index
    %342 = memref.load %arg0[%c0_166, %c2_167] : memref<4x3xf32, #tpu.memory_space<smem>>
    %343 = vector.broadcast %342 : f32 to vector<1x1xf32>
    %344 = arith.mulf %341, %343 : vector<1x1xf32>
    %c1_168 = arith.constant 1 : index
    %c1_169 = arith.constant 1 : index
    %345 = memref.load %arg3[%c1_168, %c1_169] : memref<5x4xf32, #tpu.memory_space<smem>>
    %346 = vector.broadcast %345 : f32 to vector<1x1xf32>
    %347 = arith.mulf %346, %88 : vector<1x1xf32>
    %c1_170 = arith.constant 1 : index
    %c2_171 = arith.constant 2 : index
    %348 = memref.load %arg0[%c1_170, %c2_171] : memref<4x3xf32, #tpu.memory_space<smem>>
    %349 = vector.broadcast %348 : f32 to vector<1x1xf32>
    %350 = arith.mulf %347, %349 : vector<1x1xf32>
    %351 = arith.addf %344, %350 : vector<1x1xf32>
    %c1_172 = arith.constant 1 : index
    %c2_173 = arith.constant 2 : index
    %352 = memref.load %arg3[%c1_172, %c2_173] : memref<5x4xf32, #tpu.memory_space<smem>>
    %353 = vector.broadcast %352 : f32 to vector<1x1xf32>
    %354 = arith.mulf %353, %128 : vector<1x1xf32>
    %c2_174 = arith.constant 2 : index
    %c2_175 = arith.constant 2 : index
    %355 = memref.load %arg0[%c2_174, %c2_175] : memref<4x3xf32, #tpu.memory_space<smem>>
    %356 = vector.broadcast %355 : f32 to vector<1x1xf32>
    %357 = arith.mulf %354, %356 : vector<1x1xf32>
    %358 = arith.addf %351, %357 : vector<1x1xf32>
    %c1_176 = arith.constant 1 : index
    %c3_177 = arith.constant 3 : index
    %359 = memref.load %arg3[%c1_176, %c3_177] : memref<5x4xf32, #tpu.memory_space<smem>>
    %360 = vector.broadcast %359 : f32 to vector<1x1xf32>
    %361 = arith.mulf %360, %168 : vector<1x1xf32>
    %c3_178 = arith.constant 3 : index
    %c2_179 = arith.constant 2 : index
    %362 = memref.load %arg0[%c3_178, %c2_179] : memref<4x3xf32, #tpu.memory_space<smem>>
    %363 = vector.broadcast %362 : f32 to vector<1x1xf32>
    %364 = arith.mulf %361, %363 : vector<1x1xf32>
    %365 = arith.addf %358, %364 : vector<1x1xf32>
    %c1_180 = arith.constant 1 : index
    %366 = memref.load %arg4[%c1_180] : memref<5xf32, #tpu.memory_space<smem>>
    %c1_181 = arith.constant 1 : index
    %c0_182 = arith.constant 0 : index
    %367 = memref.load %arg3[%c1_181, %c0_182] : memref<5x4xf32, #tpu.memory_space<smem>>
    %368 = vector.broadcast %367 : f32 to vector<1x1xf32>
    %369 = arith.mulf %368, %52 : vector<1x1xf32>
    %370 = vector.broadcast %366 : f32 to vector<1x1xf32>
    %371 = arith.addf %370, %369 : vector<1x1xf32>
    %c1_183 = arith.constant 1 : index
    %c1_184 = arith.constant 1 : index
    %372 = memref.load %arg3[%c1_183, %c1_184] : memref<5x4xf32, #tpu.memory_space<smem>>
    %373 = vector.broadcast %372 : f32 to vector<1x1xf32>
    %374 = arith.mulf %373, %92 : vector<1x1xf32>
    %375 = arith.addf %371, %374 : vector<1x1xf32>
    %c1_185 = arith.constant 1 : index
    %c2_186 = arith.constant 2 : index
    %376 = memref.load %arg3[%c1_185, %c2_186] : memref<5x4xf32, #tpu.memory_space<smem>>
    %377 = vector.broadcast %376 : f32 to vector<1x1xf32>
    %378 = arith.mulf %377, %132 : vector<1x1xf32>
    %379 = arith.addf %375, %378 : vector<1x1xf32>
    %c1_187 = arith.constant 1 : index
    %c3_188 = arith.constant 3 : index
    %380 = memref.load %arg3[%c1_187, %c3_188] : memref<5x4xf32, #tpu.memory_space<smem>>
    %381 = vector.broadcast %380 : f32 to vector<1x1xf32>
    %382 = arith.mulf %381, %172 : vector<1x1xf32>
    %383 = arith.addf %379, %382 : vector<1x1xf32>
    %384 = vector.broadcast %311 : vector<1x1xf32> to vector<8x128xf32>
    %385 = arith.mulf %384, %1 : vector<8x128xf32>
    %386 = vector.broadcast %338 : vector<1x1xf32> to vector<8x128xf32>
    %387 = arith.mulf %386, %3 : vector<8x128xf32>
    %388 = arith.addf %385, %387 : vector<8x128xf32>
    %389 = vector.broadcast %365 : vector<1x1xf32> to vector<8x128xf32>
    %390 = arith.mulf %389, %5 : vector<8x128xf32>
    %391 = arith.addf %388, %390 : vector<8x128xf32>
    %392 = vector.broadcast %383 : vector<1x1xf32> to vector<8x128xf32>
    %393 = arith.addf %391, %392 : vector<8x128xf32>
    %c1_189 = arith.constant 1 : index
    %c0_190 = arith.constant 0 : index
    %c0_191 = arith.constant 0 : index
    %394 = vector.load %arg6[%c1_189, %c0_190, %c0_191] : memref<5x8x128xf32, #tpu.memory_space<vmem>>, vector<1x8x128xf32>
    %395 = vector.shape_cast %394 : vector<1x8x128xf32> to vector<8x128xf32>
    %396 = vector.shape_cast %393 : vector<8x128xf32> to vector<1x8x128xf32>
    tpu.vector_store %arg6[%c1_189, %c0_190, %c0_191], %396 {strides = array<i32>} : memref<5x8x128xf32, #tpu.memory_space<vmem>>, vector<1x8x128xf32>,
    %c2_192 = arith.constant 2 : index
    %c0_193 = arith.constant 0 : index
    %397 = memref.load %arg3[%c2_192, %c0_193] : memref<5x4xf32, #tpu.memory_space<smem>>
    %398 = vector.broadcast %397 : f32 to vector<1x1xf32>
    %399 = arith.mulf %398, %48 : vector<1x1xf32>
    %c0_194 = arith.constant 0 : index
    %c0_195 = arith.constant 0 : index
    %400 = memref.load %arg0[%c0_194, %c0_195] : memref<4x3xf32, #tpu.memory_space<smem>>
    %401 = vector.broadcast %400 : f32 to vector<1x1xf32>
    %402 = arith.mulf %399, %401 : vector<1x1xf32>
    %c2_196 = arith.constant 2 : index
    %c1_197 = arith.constant 1 : index
    %403 = memref.load %arg3[%c2_196, %c1_197] : memref<5x4xf32, #tpu.memory_space<smem>>
    %404 = vector.broadcast %403 : f32 to vector<1x1xf32>
    %405 = arith.mulf %404, %88 : vector<1x1xf32>
    %c1_198 = arith.constant 1 : index
    %c0_199 = arith.constant 0 : index
    %406 = memref.load %arg0[%c1_198, %c0_199] : memref<4x3xf32, #tpu.memory_space<smem>>
    %407 = vector.broadcast %406 : f32 to vector<1x1xf32>
    %408 = arith.mulf %405, %407 : vector<1x1xf32>
    %409 = arith.addf %402, %408 : vector<1x1xf32>
    %c2_200 = arith.constant 2 : index
    %c2_201 = arith.constant 2 : index
    %410 = memref.load %arg3[%c2_200, %c2_201] : memref<5x4xf32, #tpu.memory_space<smem>>
    %411 = vector.broadcast %410 : f32 to vector<1x1xf32>
    %412 = arith.mulf %411, %128 : vector<1x1xf32>
    %c2_202 = arith.constant 2 : index
    %c0_203 = arith.constant 0 : index
    %413 = memref.load %arg0[%c2_202, %c0_203] : memref<4x3xf32, #tpu.memory_space<smem>>
    %414 = vector.broadcast %413 : f32 to vector<1x1xf32>
    %415 = arith.mulf %412, %414 : vector<1x1xf32>
    %416 = arith.addf %409, %415 : vector<1x1xf32>
    %c2_204 = arith.constant 2 : index
    %c3_205 = arith.constant 3 : index
    %417 = memref.load %arg3[%c2_204, %c3_205] : memref<5x4xf32, #tpu.memory_space<smem>>
    %418 = vector.broadcast %417 : f32 to vector<1x1xf32>
    %419 = arith.mulf %418, %168 : vector<1x1xf32>
    %c3_206 = arith.constant 3 : index
    %c0_207 = arith.constant 0 : index
    %420 = memref.load %arg0[%c3_206, %c0_207] : memref<4x3xf32, #tpu.memory_space<smem>>
    %421 = vector.broadcast %420 : f32 to vector<1x1xf32>
    %422 = arith.mulf %419, %421 : vector<1x1xf32>
    %423 = arith.addf %416, %422 : vector<1x1xf32>
    %c2_208 = arith.constant 2 : index
    %c0_209 = arith.constant 0 : index
    %424 = memref.load %arg3[%c2_208, %c0_209] : memref<5x4xf32, #tpu.memory_space<smem>>
    %425 = vector.broadcast %424 : f32 to vector<1x1xf32>
    %426 = arith.mulf %425, %48 : vector<1x1xf32>
    %c0_210 = arith.constant 0 : index
    %c1_211 = arith.constant 1 : index
    %427 = memref.load %arg0[%c0_210, %c1_211] : memref<4x3xf32, #tpu.memory_space<smem>>
    %428 = vector.broadcast %427 : f32 to vector<1x1xf32>
    %429 = arith.mulf %426, %428 : vector<1x1xf32>
    %c2_212 = arith.constant 2 : index
    %c1_213 = arith.constant 1 : index
    %430 = memref.load %arg3[%c2_212, %c1_213] : memref<5x4xf32, #tpu.memory_space<smem>>
    %431 = vector.broadcast %430 : f32 to vector<1x1xf32>
    %432 = arith.mulf %431, %88 : vector<1x1xf32>
    %c1_214 = arith.constant 1 : index
    %c1_215 = arith.constant 1 : index
    %433 = memref.load %arg0[%c1_214, %c1_215] : memref<4x3xf32, #tpu.memory_space<smem>>
    %434 = vector.broadcast %433 : f32 to vector<1x1xf32>
    %435 = arith.mulf %432, %434 : vector<1x1xf32>
    %436 = arith.addf %429, %435 : vector<1x1xf32>
    %c2_216 = arith.constant 2 : index
    %c2_217 = arith.constant 2 : index
    %437 = memref.load %arg3[%c2_216, %c2_217] : memref<5x4xf32, #tpu.memory_space<smem>>
    %438 = vector.broadcast %437 : f32 to vector<1x1xf32>
    %439 = arith.mulf %438, %128 : vector<1x1xf32>
    %c2_218 = arith.constant 2 : index
    %c1_219 = arith.constant 1 : index
    %440 = memref.load %arg0[%c2_218, %c1_219] : memref<4x3xf32, #tpu.memory_space<smem>>
    %441 = vector.broadcast %440 : f32 to vector<1x1xf32>
    %442 = arith.mulf %439, %441 : vector<1x1xf32>
    %443 = arith.addf %436, %442 : vector<1x1xf32>
    %c2_220 = arith.constant 2 : index
    %c3_221 = arith.constant 3 : index
    %444 = memref.load %arg3[%c2_220, %c3_221] : memref<5x4xf32, #tpu.memory_space<smem>>
    %445 = vector.broadcast %444 : f32 to vector<1x1xf32>
    %446 = arith.mulf %445, %168 : vector<1x1xf32>
    %c3_222 = arith.constant 3 : index
    %c1_223 = arith.constant 1 : index
    %447 = memref.load %arg0[%c3_222, %c1_223] : memref<4x3xf32, #tpu.memory_space<smem>>
    %448 = vector.broadcast %447 : f32 to vector<1x1xf32>
    %449 = arith.mulf %446, %448 : vector<1x1xf32>
    %450 = arith.addf %443, %449 : vector<1x1xf32>
    %c2_224 = arith.constant 2 : index
    %c0_225 = arith.constant 0 : index
    %451 = memref.load %arg3[%c2_224, %c0_225] : memref<5x4xf32, #tpu.memory_space<smem>>
    %452 = vector.broadcast %451 : f32 to vector<1x1xf32>
    %453 = arith.mulf %452, %48 : vector<1x1xf32>
    %c0_226 = arith.constant 0 : index
    %c2_227 = arith.constant 2 : index
    %454 = memref.load %arg0[%c0_226, %c2_227] : memref<4x3xf32, #tpu.memory_space<smem>>
    %455 = vector.broadcast %454 : f32 to vector<1x1xf32>
    %456 = arith.mulf %453, %455 : vector<1x1xf32>
    %c2_228 = arith.constant 2 : index
    %c1_229 = arith.constant 1 : index
    %457 = memref.load %arg3[%c2_228, %c1_229] : memref<5x4xf32, #tpu.memory_space<smem>>
    %458 = vector.broadcast %457 : f32 to vector<1x1xf32>
    %459 = arith.mulf %458, %88 : vector<1x1xf32>
    %c1_230 = arith.constant 1 : index
    %c2_231 = arith.constant 2 : index
    %460 = memref.load %arg0[%c1_230, %c2_231] : memref<4x3xf32, #tpu.memory_space<smem>>
    %461 = vector.broadcast %460 : f32 to vector<1x1xf32>
    %462 = arith.mulf %459, %461 : vector<1x1xf32>
    %463 = arith.addf %456, %462 : vector<1x1xf32>
    %c2_232 = arith.constant 2 : index
    %c2_233 = arith.constant 2 : index
    %464 = memref.load %arg3[%c2_232, %c2_233] : memref<5x4xf32, #tpu.memory_space<smem>>
    %465 = vector.broadcast %464 : f32 to vector<1x1xf32>
    %466 = arith.mulf %465, %128 : vector<1x1xf32>
    %c2_234 = arith.constant 2 : index
    %c2_235 = arith.constant 2 : index
    %467 = memref.load %arg0[%c2_234, %c2_235] : memref<4x3xf32, #tpu.memory_space<smem>>
    %468 = vector.broadcast %467 : f32 to vector<1x1xf32>
    %469 = arith.mulf %466, %468 : vector<1x1xf32>
    %470 = arith.addf %463, %469 : vector<1x1xf32>
    %c2_236 = arith.constant 2 : index
    %c3_237 = arith.constant 3 : index
    %471 = memref.load %arg3[%c2_236, %c3_237] : memref<5x4xf32, #tpu.memory_space<smem>>
    %472 = vector.broadcast %471 : f32 to vector<1x1xf32>
    %473 = arith.mulf %472, %168 : vector<1x1xf32>
    %c3_238 = arith.constant 3 : index
    %c2_239 = arith.constant 2 : index
    %474 = memref.load %arg0[%c3_238, %c2_239] : memref<4x3xf32, #tpu.memory_space<smem>>
    %475 = vector.broadcast %474 : f32 to vector<1x1xf32>
    %476 = arith.mulf %473, %475 : vector<1x1xf32>
    %477 = arith.addf %470, %476 : vector<1x1xf32>
    %c2_240 = arith.constant 2 : index
    %478 = memref.load %arg4[%c2_240] : memref<5xf32, #tpu.memory_space<smem>>
    %c2_241 = arith.constant 2 : index
    %c0_242 = arith.constant 0 : index
    %479 = memref.load %arg3[%c2_241, %c0_242] : memref<5x4xf32, #tpu.memory_space<smem>>
    %480 = vector.broadcast %479 : f32 to vector<1x1xf32>
    %481 = arith.mulf %480, %52 : vector<1x1xf32>
    %482 = vector.broadcast %478 : f32 to vector<1x1xf32>
    %483 = arith.addf %482, %481 : vector<1x1xf32>
    %c2_243 = arith.constant 2 : index
    %c1_244 = arith.constant 1 : index
    %484 = memref.load %arg3[%c2_243, %c1_244] : memref<5x4xf32, #tpu.memory_space<smem>>
    %485 = vector.broadcast %484 : f32 to vector<1x1xf32>
    %486 = arith.mulf %485, %92 : vector<1x1xf32>
    %487 = arith.addf %483, %486 : vector<1x1xf32>
    %c2_245 = arith.constant 2 : index
    %c2_246 = arith.constant 2 : index
    %488 = memref.load %arg3[%c2_245, %c2_246] : memref<5x4xf32, #tpu.memory_space<smem>>
    %489 = vector.broadcast %488 : f32 to vector<1x1xf32>
    %490 = arith.mulf %489, %132 : vector<1x1xf32>
    %491 = arith.addf %487, %490 : vector<1x1xf32>
    %c2_247 = arith.constant 2 : index
    %c3_248 = arith.constant 3 : index
    %492 = memref.load %arg3[%c2_247, %c3_248] : memref<5x4xf32, #tpu.memory_space<smem>>
    %493 = vector.broadcast %492 : f32 to vector<1x1xf32>
    %494 = arith.mulf %493, %172 : vector<1x1xf32>
    %495 = arith.addf %491, %494 : vector<1x1xf32>
    %496 = vector.broadcast %423 : vector<1x1xf32> to vector<8x128xf32>
    %497 = arith.mulf %496, %1 : vector<8x128xf32>
    %498 = vector.broadcast %450 : vector<1x1xf32> to vector<8x128xf32>
    %499 = arith.mulf %498, %3 : vector<8x128xf32>
    %500 = arith.addf %497, %499 : vector<8x128xf32>
    %501 = vector.broadcast %477 : vector<1x1xf32> to vector<8x128xf32>
    %502 = arith.mulf %501, %5 : vector<8x128xf32>
    %503 = arith.addf %500, %502 : vector<8x128xf32>
    %504 = vector.broadcast %495 : vector<1x1xf32> to vector<8x128xf32>
    %505 = arith.addf %503, %504 : vector<8x128xf32>
    %c2_249 = arith.constant 2 : index
    %c0_250 = arith.constant 0 : index
    %c0_251 = arith.constant 0 : index
    %506 = vector.load %arg6[%c2_249, %c0_250, %c0_251] : memref<5x8x128xf32, #tpu.memory_space<vmem>>, vector<1x8x128xf32>
    %507 = vector.shape_cast %506 : vector<1x8x128xf32> to vector<8x128xf32>
    %508 = vector.shape_cast %505 : vector<8x128xf32> to vector<1x8x128xf32>
    tpu.vector_store %arg6[%c2_249, %c0_250, %c0_251], %508 {strides = array<i32>} : memref<5x8x128xf32, #tpu.memory_space<vmem>>, vector<1x8x128xf32>,
    %c3_252 = arith.constant 3 : index
    %c0_253 = arith.constant 0 : index
    %509 = memref.load %arg3[%c3_252, %c0_253] : memref<5x4xf32, #tpu.memory_space<smem>>
    %510 = vector.broadcast %509 : f32 to vector<1x1xf32>
    %511 = arith.mulf %510, %48 : vector<1x1xf32>
    %c0_254 = arith.constant 0 : index
    %c0_255 = arith.constant 0 : index
    %512 = memref.load %arg0[%c0_254, %c0_255] : memref<4x3xf32, #tpu.memory_space<smem>>
    %513 = vector.broadcast %512 : f32 to vector<1x1xf32>
    %514 = arith.mulf %511, %513 : vector<1x1xf32>
    %c3_256 = arith.constant 3 : index
    %c1_257 = arith.constant 1 : index
    %515 = memref.load %arg3[%c3_256, %c1_257] : memref<5x4xf32, #tpu.memory_space<smem>>
    %516 = vector.broadcast %515 : f32 to vector<1x1xf32>
    %517 = arith.mulf %516, %88 : vector<1x1xf32>
    %c1_258 = arith.constant 1 : index
    %c0_259 = arith.constant 0 : index
    %518 = memref.load %arg0[%c1_258, %c0_259] : memref<4x3xf32, #tpu.memory_space<smem>>
    %519 = vector.broadcast %518 : f32 to vector<1x1xf32>
    %520 = arith.mulf %517, %519 : vector<1x1xf32>
    %521 = arith.addf %514, %520 : vector<1x1xf32>
    %c3_260 = arith.constant 3 : index
    %c2_261 = arith.constant 2 : index
    %522 = memref.load %arg3[%c3_260, %c2_261] : memref<5x4xf32, #tpu.memory_space<smem>>
    %523 = vector.broadcast %522 : f32 to vector<1x1xf32>
    %524 = arith.mulf %523, %128 : vector<1x1xf32>
    %c2_262 = arith.constant 2 : index
    %c0_263 = arith.constant 0 : index
    %525 = memref.load %arg0[%c2_262, %c0_263] : memref<4x3xf32, #tpu.memory_space<smem>>
    %526 = vector.broadcast %525 : f32 to vector<1x1xf32>
    %527 = arith.mulf %524, %526 : vector<1x1xf32>
    %528 = arith.addf %521, %527 : vector<1x1xf32>
    %c3_264 = arith.constant 3 : index
    %c3_265 = arith.constant 3 : index
    %529 = memref.load %arg3[%c3_264, %c3_265] : memref<5x4xf32, #tpu.memory_space<smem>>
    %530 = vector.broadcast %529 : f32 to vector<1x1xf32>
    %531 = arith.mulf %530, %168 : vector<1x1xf32>
    %c3_266 = arith.constant 3 : index
    %c0_267 = arith.constant 0 : index
    %532 = memref.load %arg0[%c3_266, %c0_267] : memref<4x3xf32, #tpu.memory_space<smem>>
    %533 = vector.broadcast %532 : f32 to vector<1x1xf32>
    %534 = arith.mulf %531, %533 : vector<1x1xf32>
    %535 = arith.addf %528, %534 : vector<1x1xf32>
    %c3_268 = arith.constant 3 : index
    %c0_269 = arith.constant 0 : index
    %536 = memref.load %arg3[%c3_268, %c0_269] : memref<5x4xf32, #tpu.memory_space<smem>>
    %537 = vector.broadcast %536 : f32 to vector<1x1xf32>
    %538 = arith.mulf %537, %48 : vector<1x1xf32>
    %c0_270 = arith.constant 0 : index
    %c1_271 = arith.constant 1 : index
    %539 = memref.load %arg0[%c0_270, %c1_271] : memref<4x3xf32, #tpu.memory_space<smem>>
    %540 = vector.broadcast %539 : f32 to vector<1x1xf32>
    %541 = arith.mulf %538, %540 : vector<1x1xf32>
    %c3_272 = arith.constant 3 : index
    %c1_273 = arith.constant 1 : index
    %542 = memref.load %arg3[%c3_272, %c1_273] : memref<5x4xf32, #tpu.memory_space<smem>>
    %543 = vector.broadcast %542 : f32 to vector<1x1xf32>
    %544 = arith.mulf %543, %88 : vector<1x1xf32>
    %c1_274 = arith.constant 1 : index
    %c1_275 = arith.constant 1 : index
    %545 = memref.load %arg0[%c1_274, %c1_275] : memref<4x3xf32, #tpu.memory_space<smem>>
    %546 = vector.broadcast %545 : f32 to vector<1x1xf32>
    %547 = arith.mulf %544, %546 : vector<1x1xf32>
    %548 = arith.addf %541, %547 : vector<1x1xf32>
    %c3_276 = arith.constant 3 : index
    %c2_277 = arith.constant 2 : index
    %549 = memref.load %arg3[%c3_276, %c2_277] : memref<5x4xf32, #tpu.memory_space<smem>>
    %550 = vector.broadcast %549 : f32 to vector<1x1xf32>
    %551 = arith.mulf %550, %128 : vector<1x1xf32>
    %c2_278 = arith.constant 2 : index
    %c1_279 = arith.constant 1 : index
    %552 = memref.load %arg0[%c2_278, %c1_279] : memref<4x3xf32, #tpu.memory_space<smem>>
    %553 = vector.broadcast %552 : f32 to vector<1x1xf32>
    %554 = arith.mulf %551, %553 : vector<1x1xf32>
    %555 = arith.addf %548, %554 : vector<1x1xf32>
    %c3_280 = arith.constant 3 : index
    %c3_281 = arith.constant 3 : index
    %556 = memref.load %arg3[%c3_280, %c3_281] : memref<5x4xf32, #tpu.memory_space<smem>>
    %557 = vector.broadcast %556 : f32 to vector<1x1xf32>
    %558 = arith.mulf %557, %168 : vector<1x1xf32>
    %c3_282 = arith.constant 3 : index
    %c1_283 = arith.constant 1 : index
    %559 = memref.load %arg0[%c3_282, %c1_283] : memref<4x3xf32, #tpu.memory_space<smem>>
    %560 = vector.broadcast %559 : f32 to vector<1x1xf32>
    %561 = arith.mulf %558, %560 : vector<1x1xf32>
    %562 = arith.addf %555, %561 : vector<1x1xf32>
    %c3_284 = arith.constant 3 : index
    %c0_285 = arith.constant 0 : index
    %563 = memref.load %arg3[%c3_284, %c0_285] : memref<5x4xf32, #tpu.memory_space<smem>>
    %564 = vector.broadcast %563 : f32 to vector<1x1xf32>
    %565 = arith.mulf %564, %48 : vector<1x1xf32>
    %c0_286 = arith.constant 0 : index
    %c2_287 = arith.constant 2 : index
    %566 = memref.load %arg0[%c0_286, %c2_287] : memref<4x3xf32, #tpu.memory_space<smem>>
    %567 = vector.broadcast %566 : f32 to vector<1x1xf32>
    %568 = arith.mulf %565, %567 : vector<1x1xf32>
    %c3_288 = arith.constant 3 : index
    %c1_289 = arith.constant 1 : index
    %569 = memref.load %arg3[%c3_288, %c1_289] : memref<5x4xf32, #tpu.memory_space<smem>>
    %570 = vector.broadcast %569 : f32 to vector<1x1xf32>
    %571 = arith.mulf %570, %88 : vector<1x1xf32>
    %c1_290 = arith.constant 1 : index
    %c2_291 = arith.constant 2 : index
    %572 = memref.load %arg0[%c1_290, %c2_291] : memref<4x3xf32, #tpu.memory_space<smem>>
    %573 = vector.broadcast %572 : f32 to vector<1x1xf32>
    %574 = arith.mulf %571, %573 : vector<1x1xf32>
    %575 = arith.addf %568, %574 : vector<1x1xf32>
    %c3_292 = arith.constant 3 : index
    %c2_293 = arith.constant 2 : index
    %576 = memref.load %arg3[%c3_292, %c2_293] : memref<5x4xf32, #tpu.memory_space<smem>>
    %577 = vector.broadcast %576 : f32 to vector<1x1xf32>
    %578 = arith.mulf %577, %128 : vector<1x1xf32>
    %c2_294 = arith.constant 2 : index
    %c2_295 = arith.constant 2 : index
    %579 = memref.load %arg0[%c2_294, %c2_295] : memref<4x3xf32, #tpu.memory_space<smem>>
    %580 = vector.broadcast %579 : f32 to vector<1x1xf32>
    %581 = arith.mulf %578, %580 : vector<1x1xf32>
    %582 = arith.addf %575, %581 : vector<1x1xf32>
    %c3_296 = arith.constant 3 : index
    %c3_297 = arith.constant 3 : index
    %583 = memref.load %arg3[%c3_296, %c3_297] : memref<5x4xf32, #tpu.memory_space<smem>>
    %584 = vector.broadcast %583 : f32 to vector<1x1xf32>
    %585 = arith.mulf %584, %168 : vector<1x1xf32>
    %c3_298 = arith.constant 3 : index
    %c2_299 = arith.constant 2 : index
    %586 = memref.load %arg0[%c3_298, %c2_299] : memref<4x3xf32, #tpu.memory_space<smem>>
    %587 = vector.broadcast %586 : f32 to vector<1x1xf32>
    %588 = arith.mulf %585, %587 : vector<1x1xf32>
    %589 = arith.addf %582, %588 : vector<1x1xf32>
    %c3_300 = arith.constant 3 : index
    %590 = memref.load %arg4[%c3_300] : memref<5xf32, #tpu.memory_space<smem>>
    %c3_301 = arith.constant 3 : index
    %c0_302 = arith.constant 0 : index
    %591 = memref.load %arg3[%c3_301, %c0_302] : memref<5x4xf32, #tpu.memory_space<smem>>
    %592 = vector.broadcast %591 : f32 to vector<1x1xf32>
    %593 = arith.mulf %592, %52 : vector<1x1xf32>
    %594 = vector.broadcast %590 : f32 to vector<1x1xf32>
    %595 = arith.addf %594, %593 : vector<1x1xf32>
    %c3_303 = arith.constant 3 : index
    %c1_304 = arith.constant 1 : index
    %596 = memref.load %arg3[%c3_303, %c1_304] : memref<5x4xf32, #tpu.memory_space<smem>>
    %597 = vector.broadcast %596 : f32 to vector<1x1xf32>
    %598 = arith.mulf %597, %92 : vector<1x1xf32>
    %599 = arith.addf %595, %598 : vector<1x1xf32>
    %c3_305 = arith.constant 3 : index
    %c2_306 = arith.constant 2 : index
    %600 = memref.load %arg3[%c3_305, %c2_306] : memref<5x4xf32, #tpu.memory_space<smem>>
    %601 = vector.broadcast %600 : f32 to vector<1x1xf32>
    %602 = arith.mulf %601, %132 : vector<1x1xf32>
    %603 = arith.addf %599, %602 : vector<1x1xf32>
    %c3_307 = arith.constant 3 : index
    %c3_308 = arith.constant 3 : index
    %604 = memref.load %arg3[%c3_307, %c3_308] : memref<5x4xf32, #tpu.memory_space<smem>>
    %605 = vector.broadcast %604 : f32 to vector<1x1xf32>
    %606 = arith.mulf %605, %172 : vector<1x1xf32>
    %607 = arith.addf %603, %606 : vector<1x1xf32>
    %608 = vector.broadcast %535 : vector<1x1xf32> to vector<8x128xf32>
    %609 = arith.mulf %608, %1 : vector<8x128xf32>
    %610 = vector.broadcast %562 : vector<1x1xf32> to vector<8x128xf32>
    %611 = arith.mulf %610, %3 : vector<8x128xf32>
    %612 = arith.addf %609, %611 : vector<8x128xf32>
    %613 = vector.broadcast %589 : vector<1x1xf32> to vector<8x128xf32>
    %614 = arith.mulf %613, %5 : vector<8x128xf32>
    %615 = arith.addf %612, %614 : vector<8x128xf32>
    %616 = vector.broadcast %607 : vector<1x1xf32> to vector<8x128xf32>
    %617 = arith.addf %615, %616 : vector<8x128xf32>
    %c3_309 = arith.constant 3 : index
    %c0_310 = arith.constant 0 : index
    %c0_311 = arith.constant 0 : index
    %618 = vector.load %arg6[%c3_309, %c0_310, %c0_311] : memref<5x8x128xf32, #tpu.memory_space<vmem>>, vector<1x8x128xf32>
    %619 = vector.shape_cast %618 : vector<1x8x128xf32> to vector<8x128xf32>
    %620 = vector.shape_cast %617 : vector<8x128xf32> to vector<1x8x128xf32>
    tpu.vector_store %arg6[%c3_309, %c0_310, %c0_311], %620 {strides = array<i32>} : memref<5x8x128xf32, #tpu.memory_space<vmem>>, vector<1x8x128xf32>,
    %c4 = arith.constant 4 : index
    %c0_312 = arith.constant 0 : index
    %621 = memref.load %arg3[%c4, %c0_312] : memref<5x4xf32, #tpu.memory_space<smem>>
    %622 = vector.broadcast %621 : f32 to vector<1x1xf32>
    %623 = arith.mulf %622, %48 : vector<1x1xf32>
    %c0_313 = arith.constant 0 : index
    %c0_314 = arith.constant 0 : index
    %624 = memref.load %arg0[%c0_313, %c0_314] : memref<4x3xf32, #tpu.memory_space<smem>>
    %625 = vector.broadcast %624 : f32 to vector<1x1xf32>
    %626 = arith.mulf %623, %625 : vector<1x1xf32>
    %c4_315 = arith.constant 4 : index
    %c1_316 = arith.constant 1 : index
    %627 = memref.load %arg3[%c4_315, %c1_316] : memref<5x4xf32, #tpu.memory_space<smem>>
    %628 = vector.broadcast %627 : f32 to vector<1x1xf32>
    %629 = arith.mulf %628, %88 : vector<1x1xf32>
    %c1_317 = arith.constant 1 : index
    %c0_318 = arith.constant 0 : index
    %630 = memref.load %arg0[%c1_317, %c0_318] : memref<4x3xf32, #tpu.memory_space<smem>>
    %631 = vector.broadcast %630 : f32 to vector<1x1xf32>
    %632 = arith.mulf %629, %631 : vector<1x1xf32>
    %633 = arith.addf %626, %632 : vector<1x1xf32>
    %c4_319 = arith.constant 4 : index
    %c2_320 = arith.constant 2 : index
    %634 = memref.load %arg3[%c4_319, %c2_320] : memref<5x4xf32, #tpu.memory_space<smem>>
    %635 = vector.broadcast %634 : f32 to vector<1x1xf32>
    %636 = arith.mulf %635, %128 : vector<1x1xf32>
    %c2_321 = arith.constant 2 : index
    %c0_322 = arith.constant 0 : index
    %637 = memref.load %arg0[%c2_321, %c0_322] : memref<4x3xf32, #tpu.memory_space<smem>>
    %638 = vector.broadcast %637 : f32 to vector<1x1xf32>
    %639 = arith.mulf %636, %638 : vector<1x1xf32>
    %640 = arith.addf %633, %639 : vector<1x1xf32>
    %c4_323 = arith.constant 4 : index
    %c3_324 = arith.constant 3 : index
    %641 = memref.load %arg3[%c4_323, %c3_324] : memref<5x4xf32, #tpu.memory_space<smem>>
    %642 = vector.broadcast %641 : f32 to vector<1x1xf32>
    %643 = arith.mulf %642, %168 : vector<1x1xf32>
    %c3_325 = arith.constant 3 : index
    %c0_326 = arith.constant 0 : index
    %644 = memref.load %arg0[%c3_325, %c0_326] : memref<4x3xf32, #tpu.memory_space<smem>>
    %645 = vector.broadcast %644 : f32 to vector<1x1xf32>
    %646 = arith.mulf %643, %645 : vector<1x1xf32>
    %647 = arith.addf %640, %646 : vector<1x1xf32>
    %c4_327 = arith.constant 4 : index
    %c0_328 = arith.constant 0 : index
    %648 = memref.load %arg3[%c4_327, %c0_328] : memref<5x4xf32, #tpu.memory_space<smem>>
    %649 = vector.broadcast %648 : f32 to vector<1x1xf32>
    %650 = arith.mulf %649, %48 : vector<1x1xf32>
    %c0_329 = arith.constant 0 : index
    %c1_330 = arith.constant 1 : index
    %651 = memref.load %arg0[%c0_329, %c1_330] : memref<4x3xf32, #tpu.memory_space<smem>>
    %652 = vector.broadcast %651 : f32 to vector<1x1xf32>
    %653 = arith.mulf %650, %652 : vector<1x1xf32>
    %c4_331 = arith.constant 4 : index
    %c1_332 = arith.constant 1 : index
    %654 = memref.load %arg3[%c4_331, %c1_332] : memref<5x4xf32, #tpu.memory_space<smem>>
    %655 = vector.broadcast %654 : f32 to vector<1x1xf32>
    %656 = arith.mulf %655, %88 : vector<1x1xf32>
    %c1_333 = arith.constant 1 : index
    %c1_334 = arith.constant 1 : index
    %657 = memref.load %arg0[%c1_333, %c1_334] : memref<4x3xf32, #tpu.memory_space<smem>>
    %658 = vector.broadcast %657 : f32 to vector<1x1xf32>
    %659 = arith.mulf %656, %658 : vector<1x1xf32>
    %660 = arith.addf %653, %659 : vector<1x1xf32>
    %c4_335 = arith.constant 4 : index
    %c2_336 = arith.constant 2 : index
    %661 = memref.load %arg3[%c4_335, %c2_336] : memref<5x4xf32, #tpu.memory_space<smem>>
    %662 = vector.broadcast %661 : f32 to vector<1x1xf32>
    %663 = arith.mulf %662, %128 : vector<1x1xf32>
    %c2_337 = arith.constant 2 : index
    %c1_338 = arith.constant 1 : index
    %664 = memref.load %arg0[%c2_337, %c1_338] : memref<4x3xf32, #tpu.memory_space<smem>>
    %665 = vector.broadcast %664 : f32 to vector<1x1xf32>
    %666 = arith.mulf %663, %665 : vector<1x1xf32>
    %667 = arith.addf %660, %666 : vector<1x1xf32>
    %c4_339 = arith.constant 4 : index
    %c3_340 = arith.constant 3 : index
    %668 = memref.load %arg3[%c4_339, %c3_340] : memref<5x4xf32, #tpu.memory_space<smem>>
    %669 = vector.broadcast %668 : f32 to vector<1x1xf32>
    %670 = arith.mulf %669, %168 : vector<1x1xf32>
    %c3_341 = arith.constant 3 : index
    %c1_342 = arith.constant 1 : index
    %671 = memref.load %arg0[%c3_341, %c1_342] : memref<4x3xf32, #tpu.memory_space<smem>>
    %672 = vector.broadcast %671 : f32 to vector<1x1xf32>
    %673 = arith.mulf %670, %672 : vector<1x1xf32>
    %674 = arith.addf %667, %673 : vector<1x1xf32>
    %c4_343 = arith.constant 4 : index
    %c0_344 = arith.constant 0 : index
    %675 = memref.load %arg3[%c4_343, %c0_344] : memref<5x4xf32, #tpu.memory_space<smem>>
    %676 = vector.broadcast %675 : f32 to vector<1x1xf32>
    %677 = arith.mulf %676, %48 : vector<1x1xf32>
    %c0_345 = arith.constant 0 : index
    %c2_346 = arith.constant 2 : index
    %678 = memref.load %arg0[%c0_345, %c2_346] : memref<4x3xf32, #tpu.memory_space<smem>>
    %679 = vector.broadcast %678 : f32 to vector<1x1xf32>
    %680 = arith.mulf %677, %679 : vector<1x1xf32>
    %c4_347 = arith.constant 4 : index
    %c1_348 = arith.constant 1 : index
    %681 = memref.load %arg3[%c4_347, %c1_348] : memref<5x4xf32, #tpu.memory_space<smem>>
    %682 = vector.broadcast %681 : f32 to vector<1x1xf32>
    %683 = arith.mulf %682, %88 : vector<1x1xf32>
    %c1_349 = arith.constant 1 : index
    %c2_350 = arith.constant 2 : index
    %684 = memref.load %arg0[%c1_349, %c2_350] : memref<4x3xf32, #tpu.memory_space<smem>>
    %685 = vector.broadcast %684 : f32 to vector<1x1xf32>
    %686 = arith.mulf %683, %685 : vector<1x1xf32>
    %687 = arith.addf %680, %686 : vector<1x1xf32>
    %c4_351 = arith.constant 4 : index
    %c2_352 = arith.constant 2 : index
    %688 = memref.load %arg3[%c4_351, %c2_352] : memref<5x4xf32, #tpu.memory_space<smem>>
    %689 = vector.broadcast %688 : f32 to vector<1x1xf32>
    %690 = arith.mulf %689, %128 : vector<1x1xf32>
    %c2_353 = arith.constant 2 : index
    %c2_354 = arith.constant 2 : index
    %691 = memref.load %arg0[%c2_353, %c2_354] : memref<4x3xf32, #tpu.memory_space<smem>>
    %692 = vector.broadcast %691 : f32 to vector<1x1xf32>
    %693 = arith.mulf %690, %692 : vector<1x1xf32>
    %694 = arith.addf %687, %693 : vector<1x1xf32>
    %c4_355 = arith.constant 4 : index
    %c3_356 = arith.constant 3 : index
    %695 = memref.load %arg3[%c4_355, %c3_356] : memref<5x4xf32, #tpu.memory_space<smem>>
    %696 = vector.broadcast %695 : f32 to vector<1x1xf32>
    %697 = arith.mulf %696, %168 : vector<1x1xf32>
    %c3_357 = arith.constant 3 : index
    %c2_358 = arith.constant 2 : index
    %698 = memref.load %arg0[%c3_357, %c2_358] : memref<4x3xf32, #tpu.memory_space<smem>>
    %699 = vector.broadcast %698 : f32 to vector<1x1xf32>
    %700 = arith.mulf %697, %699 : vector<1x1xf32>
    %701 = arith.addf %694, %700 : vector<1x1xf32>
    %c4_359 = arith.constant 4 : index
    %702 = memref.load %arg4[%c4_359] : memref<5xf32, #tpu.memory_space<smem>>
    %c4_360 = arith.constant 4 : index
    %c0_361 = arith.constant 0 : index
    %703 = memref.load %arg3[%c4_360, %c0_361] : memref<5x4xf32, #tpu.memory_space<smem>>
    %704 = vector.broadcast %703 : f32 to vector<1x1xf32>
    %705 = arith.mulf %704, %52 : vector<1x1xf32>
    %706 = vector.broadcast %702 : f32 to vector<1x1xf32>
    %707 = arith.addf %706, %705 : vector<1x1xf32>
    %c4_362 = arith.constant 4 : index
    %c1_363 = arith.constant 1 : index
    %708 = memref.load %arg3[%c4_362, %c1_363] : memref<5x4xf32, #tpu.memory_space<smem>>
    %709 = vector.broadcast %708 : f32 to vector<1x1xf32>
    %710 = arith.mulf %709, %92 : vector<1x1xf32>
    %711 = arith.addf %707, %710 : vector<1x1xf32>
    %c4_364 = arith.constant 4 : index
    %c2_365 = arith.constant 2 : index
    %712 = memref.load %arg3[%c4_364, %c2_365] : memref<5x4xf32, #tpu.memory_space<smem>>
    %713 = vector.broadcast %712 : f32 to vector<1x1xf32>
    %714 = arith.mulf %713, %132 : vector<1x1xf32>
    %715 = arith.addf %711, %714 : vector<1x1xf32>
    %c4_366 = arith.constant 4 : index
    %c3_367 = arith.constant 3 : index
    %716 = memref.load %arg3[%c4_366, %c3_367] : memref<5x4xf32, #tpu.memory_space<smem>>
    %717 = vector.broadcast %716 : f32 to vector<1x1xf32>
    %718 = arith.mulf %717, %172 : vector<1x1xf32>
    %719 = arith.addf %715, %718 : vector<1x1xf32>
    %720 = vector.broadcast %647 : vector<1x1xf32> to vector<8x128xf32>
    %721 = arith.mulf %720, %1 : vector<8x128xf32>
    %722 = vector.broadcast %674 : vector<1x1xf32> to vector<8x128xf32>
    %723 = arith.mulf %722, %3 : vector<8x128xf32>
    %724 = arith.addf %721, %723 : vector<8x128xf32>
    %725 = vector.broadcast %701 : vector<1x1xf32> to vector<8x128xf32>
    %726 = arith.mulf %725, %5 : vector<8x128xf32>
    %727 = arith.addf %724, %726 : vector<8x128xf32>
    %728 = vector.broadcast %719 : vector<1x1xf32> to vector<8x128xf32>
    %729 = arith.addf %727, %728 : vector<8x128xf32>
    %c4_368 = arith.constant 4 : index
    %c0_369 = arith.constant 0 : index
    %c0_370 = arith.constant 0 : index
    %730 = vector.load %arg6[%c4_368, %c0_369, %c0_370] : memref<5x8x128xf32, #tpu.memory_space<vmem>>, vector<1x8x128xf32>
    %731 = vector.shape_cast %730 : vector<1x8x128xf32> to vector<8x128xf32>
    %732 = vector.shape_cast %729 : vector<8x128xf32> to vector<1x8x128xf32>
    tpu.vector_store %arg6[%c4_368, %c0_369, %c0_370], %732 {strides = array<i32>} : memref<5x8x128xf32, #tpu.memory_space<vmem>>, vector<1x8x128xf32>,
    return
  }
}

</mosaic_0001>

<llo_original>
// kernel: model_forward.1
$region0: #{model_forward.1}
  #allocation0 [shape = 'u32[]', space=smem, size = 0x4, offset = 0x4, fixed_abs, tag = 'smem constant byte address 0x4 - core index']
  #allocation1 [shape = 'u32[144,128]{1,0:T(1,128)}', space=vmem, size = 0x12000, scoped, tag = 'internal scratch']
  %s0 = inlined_call_operand.vmem [shape: f32[4,3], index: 0, kind: input, shape index: {}]
  %s1 = inlined_call_operand.vmem [shape: f32[4], index: 1, kind: input, shape index: {}]
  %s2 = inlined_call_operand.vmem [shape: f32[4], index: 2, kind: input, shape index: {}]
  %s3 = inlined_call_operand.vmem [shape: f32[5,4], index: 3, kind: input, shape index: {}]
  %s4 = inlined_call_operand.vmem [shape: f32[5], index: 4, kind: input, shape index: {}]
  %s5 = inlined_call_operand.vmem [shape: f32[3,8,128], index: 5, kind: input, shape index: {}]
  %s6 = inlined_call_operand.vmem [shape: f32[5,8,128], index: 6, kind: output, shape index: {}]
  %s7 = sld [smem:[#allocation0]]
  $region54: #{model_forward.1} parent=0
    _
  %s9 = ssub.s32 1, %s7
  %s10 = scalar_select 0, %s9, %s7
  $region1: #{model_forward.1} parent=0
    #allocation2 [shape = 'u8[2048]{0}', space=smem, size = 0x800, scoped, tag = 'input window, operand 0, single buffered']
    #allocation3 [shape = 's32[1]{0}', space=sflag, size = 0x4, scoped, tag = 'scoped memory for model_forward.1']
    #allocation4 [shape = 'u8[512]{0}', space=smem, size = 0x200, scoped, tag = 'input window, operand 1, single buffered']
    #allocation5 [shape = 's32[1]{0}', space=sflag, size = 0x4, scoped, tag = 'scoped memory for model_forward.1']
    #allocation6 [shape = 'u8[512]{0}', space=smem, size = 0x200, scoped, tag = 'input window, operand 2, single buffered']
    #allocation7 [shape = 'u8[4096]{0}', space=smem, size = 0x1000, scoped, tag = 'input window, operand 3, single buffered']
    #allocation8 [shape = 's32[1]{0}', space=sflag, size = 0x4, scoped, tag = 'scoped memory for model_forward.1']
    #allocation9 [shape = 'u8[512]{0}', space=smem, size = 0x200, scoped, tag = 'input window, operand 4, single buffered']
    %11 = vsyncpa [#allocation3], 0
    %12 = vsyncpa [#allocation5], 0
    %13 = vsyncpa [#allocation8], 0
    // Predicated region
    $region2: #{model_forward.1} parent=1 // pred_check
      _
    $region3: #{model_forward.1} parent=1 // pred_check_branch
      %15 = sbr.rel (0) target = $region5
    $region4: #{model_forward.1} parent=1 // pred_region
      %s17 = ssub.s32 64, 64
      %18 = vsyncadd [#allocation3], %s17
      %s20 = sshll.u32 %s0, 4
      %s21 = int_to_ptr.vmem [resolvable:$true] %s20
      %23 = dma.vmem_to_smem %s21, 64, [#allocation2], [#allocation3]
    $region5: #{model_forward.1} parent=1 // pred_fallthru
      _
    // Predicated region
    $region6: #{model_forward.1} parent=1 // pred_check
      _
    $region7: #{model_forward.1} parent=1 // pred_check_branch
      %25 = sbr.rel (0) target = $region9
    $region8: #{model_forward.1} parent=1 // pred_region
      %s27 = ssub.s32 16, 16
      %28 = vsyncadd [#allocation5], %s27
      %s30 = sshll.u32 %s1, 4
      %s31 = int_to_ptr.vmem [resolvable:$true] %s30
      %33 = dma.vmem_to_smem %s31, 16, [#allocation4], [#allocation5]
    $region9: #{model_forward.1} parent=1 // pred_fallthru
      _
    // Predicated region
    $region10: #{model_forward.1} parent=1 // pred_check
      _
    $region11: #{model_forward.1} parent=1 // pred_check_branch
      %35 = sbr.rel (0) target = $region13
    $region12: #{model_forward.1} parent=1 // pred_region
      %s37 = ssub.s32 16, 16
      %38 = vsyncadd [#allocation5], %s37
      %s40 = sshll.u32 %s2, 4
      %s41 = int_to_ptr.vmem [resolvable:$true] %s40
      %43 = dma.vmem_to_smem %s41, 16, [#allocation6], [#allocation5]
    $region13: #{model_forward.1} parent=1 // pred_fallthru
      _
    // Predicated region
    $region14: #{model_forward.1} parent=1 // pred_check
      _
    $region15: #{model_forward.1} parent=1 // pred_check_branch
      %45 = sbr.rel (0) target = $region17
    $region16: #{model_forward.1} parent=1 // pred_region
      %s47 = ssub.s32 128, 128
      %48 = vsyncadd [#allocation8], %s47
      %s50 = sshll.u32 %s3, 4
      %s51 = int_to_ptr.vmem [resolvable:$true] %s50
      %53 = dma.vmem_to_smem %s51, 128, [#allocation7], [#allocation8]
    $region17: #{model_forward.1} parent=1 // pred_fallthru
      _
    // Predicated region
    $region18: #{model_forward.1} parent=1 // pred_check
      _
    $region19: #{model_forward.1} parent=1 // pred_check_branch
      %55 = sbr.rel (0) target = $region21
    $region20: #{model_forward.1} parent=1 // pred_region
      %s57 = ssub.s32 16, 16
      %58 = vsyncadd [#allocation8], %s57
      %s60 = sshll.u32 %s4, 4
      %s61 = int_to_ptr.vmem [resolvable:$true] %s60
      %63 = dma.vmem_to_smem %s61, 16, [#allocation9], [#allocation8]
    $region21: #{model_forward.1} parent=1 // pred_fallthru
      _
    // Predicated region
    $region22: #{model_forward.1} parent=1 // pred_check
      _
    $region23: #{model_forward.1} parent=1 // pred_check_branch
      %65 = sbr.rel (0) target = $region25
    $region24: #{model_forward.1} parent=1 // pred_region
      _
    $region25: #{model_forward.1} parent=1 // pred_fallthru
      _
    // Predicated region
    $region26: #{model_forward.1} parent=1 // pred_check
      _
    $region27: #{model_forward.1} parent=1 // pred_check_branch
      %67 = sbr.rel (0) target = $region29
    $region28: #{model_forward.1} parent=1 // pred_region
      %68 = dma.done [#allocation3], 64
    $region29: #{model_forward.1} parent=1 // pred_fallthru
      _
    // Predicated region
    $region30: #{model_forward.1} parent=1 // pred_check
      _
    $region31: #{model_forward.1} parent=1 // pred_check_branch
      %70 = sbr.rel (0) target = $region33
    $region32: #{model_forward.1} parent=1 // pred_region
      %71 = dma.done [#allocation5], 16
    $region33: #{model_forward.1} parent=1 // pred_fallthru
      _
    // Predicated region
    $region34: #{model_forward.1} parent=1 // pred_check
      _
    $region35: #{model_forward.1} parent=1 // pred_check_branch
      %73 = sbr.rel (0) target = $region37
    $region36: #{model_forward.1} parent=1 // pred_region
      %74 = dma.done [#allocation5], 16
    $region37: #{model_forward.1} parent=1 // pred_fallthru
      _
    // Predicated region
    $region38: #{model_forward.1} parent=1 // pred_check
      _
    $region39: #{model_forward.1} parent=1 // pred_check_branch
      %76 = sbr.rel (0) target = $region41
    $region40: #{model_forward.1} parent=1 // pred_region
      %77 = dma.done [#allocation8], 128
    $region41: #{model_forward.1} parent=1 // pred_fallthru
      _
    // Predicated region
    $region42: #{model_forward.1} parent=1 // pred_check
      _
    $region43: #{model_forward.1} parent=1 // pred_check_branch
      %79 = sbr.rel (0) target = $region45
    $region44: #{model_forward.1} parent=1 // pred_region
      %80 = dma.done [#allocation8], 16
    $region45: #{model_forward.1} parent=1 // pred_fallthru
      _
    %81 = sfence
    %v82 = vld [vmem:[%s5] sm:$0xff]
    %s83 = scalar_lea.vmem %s5, 8
    %v84 = vld [vmem:[%s83] sm:$0xff]
    %s85 = scalar_lea.vmem %s5, 16
    %v86 = vld [vmem:[%s85] sm:$0xff]
    %v87 = vlaneseq
    %v88 = vshrl.u32 %v87, 7
    %v89 = vlaneseq
    %v90 = vand.u32 %v89, 127
    %v91 = vmul.u32 %v88, 128
    %v92 = vadd.s32 %v91, %v90
    %vm93 = vcmp.lt.s32.totalorder %v92, 16
    %s94 = sld [smem:[#allocation2]]
    %v95 = vstv %s94
    %v96 = vmul.f32 %v95, %v82
    %s97 = sld [smem:[#allocation2 + $0x1]]
    %v98 = vstv %s97
    %v99 = vmul.f32 %v98, %v84
    %v100 = vadd.f32 %v96, %v99
    %s101 = sld [smem:[#allocation2 + $0x2]]
    %v102 = vstv %s101
    %v103 = vmul.f32 %v102, %v86
    %v104 = vadd.f32 %v100, %v103
    %v105 = vsel %vm93, %v104, 0.0
    %106 = vadd.xlane.f32.xlu0 %v105
    %v107 = vpop.xlane.xlu0 %106
    %v108 = vrot.slane %v107, 4
    %v109 = vadd.f32 %v107, %v108
    %v110 = vrot.slane %v109, 2
    %v111 = vadd.f32 %v109, %v110
    %v112 = vrot.slane %v111, 1
    %v113 = vadd.f32 %v111, %v112
    %v114 = vmul.f32 %v113, 0.0625
    %v115 = vsub.f32 %v104, %v114
    %v116 = vsel %vm93, %v115, 0.0
    %v117 = vmul.f32 %v116, %v116
    %118 = vadd.xlane.f32.xlu0 %v117
    %v119 = vpop.xlane.xlu0 %118
    %v120 = vrot.slane %v119, 4
    %v121 = vadd.f32 %v119, %v120
    %v122 = vrot.slane %v121, 2
    %v123 = vadd.f32 %v121, %v122
    %v124 = vrot.slane %v123, 1
    %v125 = vadd.f32 %v123, %v124
    %v126 = vmul.f32 %v125, 0.0625
    %s127 = sld [smem:[#allocation4]]
    %v128 = vadd.f32 %v126, 1e-05
    %v129 = vrsqrt.pop %v128
    %v130 = vstv %s127
    %v131 = vmul.f32 %v130, %v129
    %s132 = sld [smem:[#allocation6]]
    %v133 = vmul.f32 %v131, %v114
    %v134 = vstv %s132
    %v135 = vsub.f32 %v134, %v133
    %s136 = sld [smem:[#allocation2 + $0x80]]
    %v137 = vstv %s136
    %v138 = vmul.f32 %v137, %v82
    %s139 = sld [smem:[#allocation2 + $0x81]]
    %v140 = vstv %s139
    %v141 = vmul.f32 %v140, %v84
    %v142 = vadd.f32 %v138, %v141
    %s143 = sld [smem:[#allocation2 + $0x82]]
    %v144 = vstv %s143
    %v145 = vmul.f32 %v144, %v86
    %v146 = vadd.f32 %v142, %v145
    %v147 = vsel %vm93, %v146, 0.0
    %148 = vadd.xlane.f32.xlu0 %v147
    %v149 = vpop.xlane.xlu0 %148
    %v150 = vrot.slane %v149, 4
    %v151 = vadd.f32 %v149, %v150
    %v152 = vrot.slane %v151, 2
    %v153 = vadd.f32 %v151, %v152
    %v154 = vrot.slane %v153, 1
    %v155 = vadd.f32 %v153, %v154
    %v156 = vmul.f32 %v155, 0.0625
    %v157 = vsub.f32 %v146, %v156
    %v158 = vsel %vm93, %v157, 0.0
    %v159 = vmul.f32 %v158, %v158
    %160 = vadd.xlane.f32.xlu0 %v159
    %v161 = vpop.xlane.xlu0 %160
    %v162 = vrot.slane %v161, 4
    %v163 = vadd.f32 %v161, %v162
    %v164 = vrot.slane %v163, 2
    %v165 = vadd.f32 %v163, %v164
    %v166 = vrot.slane %v165, 1
    %v167 = vadd.f32 %v165, %v166
    %v168 = vmul.f32 %v167, 0.0625
    %s169 = sld [smem:[#allocation4 + $0x1]]
    %v170 = vadd.f32 %v168, 1e-05
    %v171 = vrsqrt.pop %v170
    %v172 = vstv %s169
    %v173 = vmul.f32 %v172, %v171
    %s174 = sld [smem:[#allocation6 + $0x1]]
    %v175 = vmul.f32 %v173, %v156
    %v176 = vstv %s174
    %v177 = vsub.f32 %v176, %v175
    %s178 = sld [smem:[#allocation2 + $0x100]]
    %v179 = vstv %s178
    %v180 = vmul.f32 %v179, %v82
    %s181 = sld [smem:[#allocation2 + $0x101]]
    %v182 = vstv %s181
    %v183 = vmul.f32 %v182, %v84
    %v184 = vadd.f32 %v180, %v183
    %s185 = sld [smem:[#allocation2 + $0x102]]
    %v186 = vstv %s185
    %v187 = vmul.f32 %v186, %v86
    %v188 = vadd.f32 %v184, %v187
    %v189 = vsel %vm93, %v188, 0.0
    %190 = vadd.xlane.f32.xlu0 %v189
    %v191 = vpop.xlane.xlu0 %190
    %v192 = vrot.slane %v191, 4
    %v193 = vadd.f32 %v191, %v192
    %v194 = vrot.slane %v193, 2
    %v195 = vadd.f32 %v193, %v194
    %v196 = vrot.slane %v195, 1
    %v197 = vadd.f32 %v195, %v196
    %v198 = vmul.f32 %v197, 0.0625
    %v199 = vsub.f32 %v188, %v198
    %v200 = vsel %vm93, %v199, 0.0
    %v201 = vmul.f32 %v200, %v200
    %202 = vadd.xlane.f32.xlu0 %v201
    %v203 = vpop.xlane.xlu0 %202
    %v204 = vrot.slane %v203, 4
    %v205 = vadd.f32 %v203, %v204
    %v206 = vrot.slane %v205, 2
    %v207 = vadd.f32 %v205, %v206
    %v208 = vrot.slane %v207, 1
    %v209 = vadd.f32 %v207, %v208
    %v210 = vmul.f32 %v209, 0.0625
    %s211 = sld [smem:[#allocation4 + $0x2]]
    %v212 = vadd.f32 %v210, 1e-05
    %v213 = vrsqrt.pop %v212
    %v214 = vstv %s211
    %v215 = vmul.f32 %v214, %v213
    %s216 = sld [smem:[#allocation6 + $0x2]]
    %v217 = vmul.f32 %v215, %v198
    %v218 = vstv %s216
    %v219 = vsub.f32 %v218, %v217
    %s220 = sld [smem:[#allocation2 + $0x180]]
    %v221 = vstv %s220
    %v222 = vmul.f32 %v221, %v82
    %s223 = sld [smem:[#allocation2 + $0x181]]
    %v224 = vstv %s223
    %v225 = vmul.f32 %v224, %v84
    %v226 = vadd.f32 %v222, %v225
    %s227 = sld [smem:[#allocation2 + $0x182]]
    %v228 = vstv %s227
    %v229 = vmul.f32 %v228, %v86
    %v230 = vadd.f32 %v226, %v229
    %v231 = vsel %vm93, %v230, 0.0
    %232 = vadd.xlane.f32.xlu0 %v231
    %v233 = vpop.xlane.xlu0 %232
    %v234 = vrot.slane %v233, 4
    %v235 = vadd.f32 %v233, %v234
    %v236 = vrot.slane %v235, 2
    %v237 = vadd.f32 %v235, %v236
    %v238 = vrot.slane %v237, 1
    %v239 = vadd.f32 %v237, %v238
    %v240 = vmul.f32 %v239, 0.0625
    %v241 = vsub.f32 %v230, %v240
    %v242 = vsel %vm93, %v241, 0.0
    %v243 = vmul.f32 %v242, %v242
    %244 = vadd.xlane.f32.xlu0 %v243
    %v245 = vpop.xlane.xlu0 %244
    %v246 = vrot.slane %v245, 4
    %v247 = vadd.f32 %v245, %v246
    %v248 = vrot.slane %v247, 2
    %v249 = vadd.f32 %v247, %v248
    %v250 = vrot.slane %v249, 1
    %v251 = vadd.f32 %v249, %v250
    %v252 = vmul.f32 %v251, 0.0625
    %s253 = sld [smem:[#allocation4 + $0x3]]
    %v254 = vadd.f32 %v252, 1e-05
    %v255 = vrsqrt.pop %v254
    %v256 = vstv %s253
    %v257 = vmul.f32 %v256, %v255
    %s258 = sld [smem:[#allocation6 + $0x3]]
    %v259 = vmul.f32 %v257, %v240
    %v260 = vstv %s258
    %v261 = vsub.f32 %v260, %v259
    %s262 = sld [smem:[#allocation7]]
    %v263 = vstv %s262
    %v264 = vmul.f32 %v263, %v131
    %v265 = vmul.f32 %v264, %v95
    %s266 = sld [smem:[#allocation7 + $0x1]]
    %v267 = vstv %s266
    %v268 = vmul.f32 %v267, %v173
    %v269 = vmul.f32 %v268, %v137
    %v270 = vadd.f32 %v265, %v269
    %s271 = sld [smem:[#allocation7 + $0x2]]
    %v272 = vstv %s271
    %v273 = vmul.f32 %v272, %v215
    %v274 = vmul.f32 %v273, %v179
    %v275 = vadd.f32 %v270, %v274
    %s276 = sld [smem:[#allocation7 + $0x3]]
    %v277 = vstv %s276
    %v278 = vmul.f32 %v277, %v257
    %v279 = vmul.f32 %v278, %v221
    %v280 = vadd.f32 %v275, %v279
    %v281 = vmul.f32 %v264, %v98
    %v282 = vmul.f32 %v268, %v140
    %v283 = vadd.f32 %v281, %v282
    %v284 = vmul.f32 %v273, %v182
    %v285 = vadd.f32 %v283, %v284
    %v286 = vmul.f32 %v278, %v224
    %v287 = vadd.f32 %v285, %v286
    %v288 = vmul.f32 %v264, %v102
    %v289 = vmul.f32 %v268, %v144
    %v290 = vadd.f32 %v288, %v289
    %v291 = vmul.f32 %v273, %v186
    %v292 = vadd.f32 %v290, %v291
    %v293 = vmul.f32 %v278, %v228
    %v294 = vadd.f32 %v292, %v293
    %s295 = sld [smem:[#allocation9]]
    %v296 = vmul.f32 %v263, %v135
    %v297 = vstv %s295
    %v298 = vadd.f32 %v297, %v296
    %v299 = vmul.f32 %v267, %v177
    %v300 = vadd.f32 %v298, %v299
    %v301 = vmul.f32 %v272, %v219
    %v302 = vadd.f32 %v300, %v301
    %v303 = vmul.f32 %v277, %v261
    %v304 = vadd.f32 %v302, %v303
    %v305 = vmul.f32 %v280, %v82
    %v306 = vmul.f32 %v287, %v84
    %v307 = vadd.f32 %v305, %v306
    %v308 = vmul.f32 %v294, %v86
    %v309 = vadd.f32 %v307, %v308
    %v310 = vadd.f32 %v309, %v304
    %311 = vst [vmem:[%s6] sm:$0xff] %v310
    %s312 = sld [smem:[#allocation7 + $0x80]]
    %v313 = vstv %s312
    %v314 = vmul.f32 %v313, %v131
    %s315 = sld [smem:[#allocation2]]
    %v316 = vstv %s315
    %v317 = vmul.f32 %v314, %v316
    %s318 = sld [smem:[#allocation7 + $0x81]]
    %v319 = vstv %s318
    %v320 = vmul.f32 %v319, %v173
    %s321 = sld [smem:[#allocation2 + $0x80]]
    %v322 = vstv %s321
    %v323 = vmul.f32 %v320, %v322
    %v324 = vadd.f32 %v317, %v323
    %s325 = sld [smem:[#allocation7 + $0x82]]
    %v326 = vstv %s325
    %v327 = vmul.f32 %v326, %v215
    %s328 = sld [smem:[#allocation2 + $0x100]]
    %v329 = vstv %s328
    %v330 = vmul.f32 %v327, %v329
    %v331 = vadd.f32 %v324, %v330
    %s332 = sld [smem:[#allocation7 + $0x83]]
    %v333 = vstv %s332
    %v334 = vmul.f32 %v333, %v257
    %s335 = sld [smem:[#allocation2 + $0x180]]
    %v336 = vstv %s335
    %v337 = vmul.f32 %v334, %v336
    %v338 = vadd.f32 %v331, %v337
    %s339 = sld [smem:[#allocation2 + $0x1]]
    %v340 = vstv %s339
    %v341 = vmul.f32 %v314, %v340
    %s342 = sld [smem:[#allocation2 + $0x81]]
    %v343 = vstv %s342
    %v344 = vmul.f32 %v320, %v343
    %v345 = vadd.f32 %v341, %v344
    %s346 = sld [smem:[#allocation2 + $0x101]]
    %v347 = vstv %s346
    %v348 = vmul.f32 %v327, %v347
    %v349 = vadd.f32 %v345, %v348
    %s350 = sld [smem:[#allocation2 + $0x181]]
    %v351 = vstv %s350
    %v352 = vmul.f32 %v334, %v351
    %v353 = vadd.f32 %v349, %v352
    %s354 = sld [smem:[#allocation2 + $0x2]]
    %v355 = vstv %s354
    %v356 = vmul.f32 %v314, %v355
    %s357 = sld [smem:[#allocation2 + $0x82]]
    %v358 = vstv %s357
    %v359 = vmul.f32 %v320, %v358
    %v360 = vadd.f32 %v356, %v359
    %s361 = sld [smem:[#allocation2 + $0x102]]
    %v362 = vstv %s361
    %v363 = vmul.f32 %v327, %v362
    %v364 = vadd.f32 %v360, %v363
    %s365 = sld [smem:[#allocation2 + $0x182]]
    %v366 = vstv %s365
    %v367 = vmul.f32 %v334, %v366
    %v368 = vadd.f32 %v364, %v367
    %s369 = sld [smem:[#allocation9 + $0x1]]
    %v370 = vmul.f32 %v313, %v135
    %v371 = vstv %s369
    %v372 = vadd.f32 %v371, %v370
    %v373 = vmul.f32 %v319, %v177
    %v374 = vadd.f32 %v372, %v373
    %v375 = vmul.f32 %v326, %v219
    %v376 = vadd.f32 %v374, %v375
    %v377 = vmul.f32 %v333, %v261
    %v378 = vadd.f32 %v376, %v377
    %v379 = vmul.f32 %v338, %v82
    %v380 = vmul.f32 %v353, %v84
    %v381 = vadd.f32 %v379, %v380
    %v382 = vmul.f32 %v368, %v86
    %v383 = vadd.f32 %v381, %v382
    %v384 = vadd.f32 %v383, %v378
    %s385 = scalar_lea.vmem %s6, 8
    %386 = vst [vmem:[%s385] sm:$0xff] %v384
    %s387 = sld [smem:[#allocation7 + $0x100]]
    %v388 = vstv %s387
    %v389 = vmul.f32 %v388, %v131
    %s390 = sld [smem:[#allocation2]]
    %v391 = vstv %s390
    %v392 = vmul.f32 %v389, %v391
    %s393 = sld [smem:[#allocation7 + $0x101]]
    %v394 = vstv %s393
    %v395 = vmul.f32 %v394, %v173
    %s396 = sld [smem:[#allocation2 + $0x80]]
    %v397 = vstv %s396
    %v398 = vmul.f32 %v395, %v397
    %v399 = vadd.f32 %v392, %v398
    %s400 = sld [smem:[#allocation7 + $0x102]]
    %v401 = vstv %s400
    %v402 = vmul.f32 %v401, %v215
    %s403 = sld [smem:[#allocation2 + $0x100]]
    %v404 = vstv %s403
    %v405 = vmul.f32 %v402, %v404
    %v406 = vadd.f32 %v399, %v405
    %s407 = sld [smem:[#allocation7 + $0x103]]
    %v408 = vstv %s407
    %v409 = vmul.f32 %v408, %v257
    %s410 = sld [smem:[#allocation2 + $0x180]]
    %v411 = vstv %s410
    %v412 = vmul.f32 %v409, %v411
    %v413 = vadd.f32 %v406, %v412
    %s414 = sld [smem:[#allocation2 + $0x1]]
    %v415 = vstv %s414
    %v416 = vmul.f32 %v389, %v415
    %s417 = sld [smem:[#allocation2 + $0x81]]
    %v418 = vstv %s417
    %v419 = vmul.f32 %v395, %v418
    %v420 = vadd.f32 %v416, %v419
    %s421 = sld [smem:[#allocation2 + $0x101]]
    %v422 = vstv %s421
    %v423 = vmul.f32 %v402, %v422
    %v424 = vadd.f32 %v420, %v423
    %s425 = sld [smem:[#allocation2 + $0x181]]
    %v426 = vstv %s425
    %v427 = vmul.f32 %v409, %v426
    %v428 = vadd.f32 %v424, %v427
    %s429 = sld [smem:[#allocation2 + $0x2]]
    %v430 = vstv %s429
    %v431 = vmul.f32 %v389, %v430
    %s432 = sld [smem:[#allocation2 + $0x82]]
    %v433 = vstv %s432
    %v434 = vmul.f32 %v395, %v433
    %v435 = vadd.f32 %v431, %v434
    %s436 = sld [smem:[#allocation2 + $0x102]]
    %v437 = vstv %s436
    %v438 = vmul.f32 %v402, %v437
    %v439 = vadd.f32 %v435, %v438
    %s440 = sld [smem:[#allocation2 + $0x182]]
    %v441 = vstv %s440
    %v442 = vmul.f32 %v409, %v441
    %v443 = vadd.f32 %v439, %v442
    %s444 = sld [smem:[#allocation9 + $0x2]]
    %v445 = vmul.f32 %v388, %v135
    %v446 = vstv %s444
    %v447 = vadd.f32 %v446, %v445
    %v448 = vmul.f32 %v394, %v177
    %v449 = vadd.f32 %v447, %v448
    %v450 = vmul.f32 %v401, %v219
    %v451 = vadd.f32 %v449, %v450
    %v452 = vmul.f32 %v408, %v261
    %v453 = vadd.f32 %v451, %v452
    %v454 = vmul.f32 %v413, %v82
    %v455 = vmul.f32 %v428, %v84
    %v456 = vadd.f32 %v454, %v455
    %v457 = vmul.f32 %v443, %v86
    %v458 = vadd.f32 %v456, %v457
    %v459 = vadd.f32 %v458, %v453
    %s460 = scalar_lea.vmem %s6, 16
    %461 = vst [vmem:[%s460] sm:$0xff] %v459
    %s462 = sld [smem:[#allocation7 + $0x180]]
    %v463 = vstv %s462
    %v464 = vmul.f32 %v463, %v131
    %s465 = sld [smem:[#allocation2]]
    %v466 = vstv %s465
    %v467 = vmul.f32 %v464, %v466
    %s468 = sld [smem:[#allocation7 + $0x181]]
    %v469 = vstv %s468
    %v470 = vmul.f32 %v469, %v173
    %s471 = sld [smem:[#allocation2 + $0x80]]
    %v472 = vstv %s471
    %v473 = vmul.f32 %v470, %v472
    %v474 = vadd.f32 %v467, %v473
    %s475 = sld [smem:[#allocation7 + $0x182]]
    %v476 = vstv %s475
    %v477 = vmul.f32 %v476, %v215
    %s478 = sld [smem:[#allocation2 + $0x100]]
    %v479 = vstv %s478
    %v480 = vmul.f32 %v477, %v479
    %v481 = vadd.f32 %v474, %v480
    %s482 = sld [smem:[#allocation7 + $0x183]]
    %v483 = vstv %s482
    %v484 = vmul.f32 %v483, %v257
    %s485 = sld [smem:[#allocation2 + $0x180]]
    %v486 = vstv %s485
    %v487 = vmul.f32 %v484, %v486
    %v488 = vadd.f32 %v481, %v487
    %s489 = sld [smem:[#allocation2 + $0x1]]
    %v490 = vstv %s489
    %v491 = vmul.f32 %v464, %v490
    %s492 = sld [smem:[#allocation2 + $0x81]]
    %v493 = vstv %s492
    %v494 = vmul.f32 %v470, %v493
    %v495 = vadd.f32 %v491, %v494
    %s496 = sld [smem:[#allocation2 + $0x101]]
    %v497 = vstv %s496
    %v498 = vmul.f32 %v477, %v497
    %v499 = vadd.f32 %v495, %v498
    %s500 = sld [smem:[#allocation2 + $0x181]]
    %v501 = vstv %s500
    %v502 = vmul.f32 %v484, %v501
    %v503 = vadd.f32 %v499, %v502
    %s504 = sld [smem:[#allocation2 + $0x2]]
    %v505 = vstv %s504
    %v506 = vmul.f32 %v464, %v505
    %s507 = sld [smem:[#allocation2 + $0x82]]
    %v508 = vstv %s507
    %v509 = vmul.f32 %v470, %v508
    %v510 = vadd.f32 %v506, %v509
    %s511 = sld [smem:[#allocation2 + $0x102]]
    %v512 = vstv %s511
    %v513 = vmul.f32 %v477, %v512
    %v514 = vadd.f32 %v510, %v513
    %s515 = sld [smem:[#allocation2 + $0x182]]
    %v516 = vstv %s515
    %v517 = vmul.f32 %v484, %v516
    %v518 = vadd.f32 %v514, %v517
    %s519 = sld [smem:[#allocation9 + $0x3]]
    %v520 = vmul.f32 %v463, %v135
    %v521 = vstv %s519
    %v522 = vadd.f32 %v521, %v520
    %v523 = vmul.f32 %v469, %v177
    %v524 = vadd.f32 %v522, %v523
    %v525 = vmul.f32 %v476, %v219
    %v526 = vadd.f32 %v524, %v525
    %v527 = vmul.f32 %v483, %v261
    %v528 = vadd.f32 %v526, %v527
    %v529 = vmul.f32 %v488, %v82
    %v530 = vmul.f32 %v503, %v84
    %v531 = vadd.f32 %v529, %v530
    %v532 = vmul.f32 %v518, %v86
    %v533 = vadd.f32 %v531, %v532
    %v534 = vadd.f32 %v533, %v528
    %s535 = scalar_lea.vmem %s6, 24
    %536 = vst [vmem:[%s535] sm:$0xff] %v534
    %s537 = sld [smem:[#allocation7 + $0x200]]
    %v538 = vstv %s537
    %v539 = vmul.f32 %v538, %v131
    %s540 = sld [smem:[#allocation2]]
    %v541 = vstv %s540
    %v542 = vmul.f32 %v539, %v541
    %s543 = sld [smem:[#allocation7 + $0x201]]
    %v544 = vstv %s543
    %v545 = vmul.f32 %v544, %v173
    %s546 = sld [smem:[#allocation2 + $0x80]]
    %v547 = vstv %s546
    %v548 = vmul.f32 %v545, %v547
    %v549 = vadd.f32 %v542, %v548
    %s550 = sld [smem:[#allocation7 + $0x202]]
    %v551 = vstv %s550
    %v552 = vmul.f32 %v551, %v215
    %s553 = sld [smem:[#allocation2 + $0x100]]
    %v554 = vstv %s553
    %v555 = vmul.f32 %v552, %v554
    %v556 = vadd.f32 %v549, %v555
    %s557 = sld [smem:[#allocation7 + $0x203]]
    %v558 = vstv %s557
    %v559 = vmul.f32 %v558, %v257
    %s560 = sld [smem:[#allocation2 + $0x180]]
    %v561 = vstv %s560
    %v562 = vmul.f32 %v559, %v561
    %v563 = vadd.f32 %v556, %v562
    %s564 = sld [smem:[#allocation2 + $0x1]]
    %v565 = vstv %s564
    %v566 = vmul.f32 %v539, %v565
    %s567 = sld [smem:[#allocation2 + $0x81]]
    %v568 = vstv %s567
    %v569 = vmul.f32 %v545, %v568
    %v570 = vadd.f32 %v566, %v569
    %s571 = sld [smem:[#allocation2 + $0x101]]
    %v572 = vstv %s571
    %v573 = vmul.f32 %v552, %v572
    %v574 = vadd.f32 %v570, %v573
    %s575 = sld [smem:[#allocation2 + $0x181]]
    %v576 = vstv %s575
    %v577 = vmul.f32 %v559, %v576
    %v578 = vadd.f32 %v574, %v577
    %s579 = sld [smem:[#allocation2 + $0x2]]
    %v580 = vstv %s579
    %v581 = vmul.f32 %v539, %v580
    %s582 = sld [smem:[#allocation2 + $0x82]]
    %v583 = vstv %s582
    %v584 = vmul.f32 %v545, %v583
    %v585 = vadd.f32 %v581, %v584
    %s586 = sld [smem:[#allocation2 + $0x102]]
    %v587 = vstv %s586
    %v588 = vmul.f32 %v552, %v587
    %v589 = vadd.f32 %v585, %v588
    %s590 = sld [smem:[#allocation2 + $0x182]]
    %v591 = vstv %s590
    %v592 = vmul.f32 %v559, %v591
    %v593 = vadd.f32 %v589, %v592
    %s594 = sld [smem:[#allocation9 + $0x4]]
    %v595 = vmul.f32 %v538, %v135
    %v596 = vstv %s594
    %v597 = vadd.f32 %v596, %v595
    %v598 = vmul.f32 %v544, %v177
    %v599 = vadd.f32 %v597, %v598
    %v600 = vmul.f32 %v551, %v219
    %v601 = vadd.f32 %v599, %v600
    %v602 = vmul.f32 %v558, %v261
    %v603 = vadd.f32 %v601, %v602
    %v604 = vmul.f32 %v563, %v82
    %v605 = vmul.f32 %v578, %v84
    %v606 = vadd.f32 %v604, %v605
    %v607 = vmul.f32 %v593, %v86
    %v608 = vadd.f32 %v606, %v607
    %v609 = vadd.f32 %v608, %v603
    %s610 = scalar_lea.vmem %s6, 32
    %611 = vst [vmem:[%s610] sm:$0xff] %v609
    // Predicated region
    $region46: #{model_forward.1} parent=1 // pred_check
      _
    $region47: #{model_forward.1} parent=1 // pred_check_branch
      %613 = sbr.rel (0) target = $region49
    $region48: #{model_forward.1} parent=1 // pred_region
      _
    $region49: #{model_forward.1} parent=1 // pred_fallthru
      _
    // Predicated region
    $region50: #{model_forward.1} parent=1 // pred_check
      _
    $region51: #{model_forward.1} parent=1 // pred_check_branch
      %615 = sbr.rel (0) target = $region53
    $region52: #{model_forward.1} parent=1 // pred_region
      _
    $region53: #{model_forward.1} parent=1 // pred_fallthru
      _
    %616 = vsyncpa [#allocation3], 1
    %617 = vsyncpa [#allocation5], 1
    %618 = vsyncpa [#allocation8], 1

</llo_original>
